<compile_context>
chip_gen: v5e
topology: v5e:2x2
jax: 0.10.0
libtpu: 0.0.40
codegen_flags: <defaults>
</compile_context>

<pallas_src>
import numpy as np

import jax
import jax.numpy as jnp
from jax.experimental import pallas as pl
from jax.experimental.pallas import tpu as pltpu


_BN_EPS = 1e-5


def _make_divisible(v, divisor, min_value=None):
    if min_value is None:
        min_value = divisor
    new_v = max(min_value, int(v + divisor / 2) // divisor * divisor)
    if new_v < 0.9 * v:
        new_v += divisor
    return new_v


def _vmem_limit_bytes():
    # Generation-aware VMEM budget (~3/4 of physical: v5e/v6e 128 MiB,
    # v7x 64 MiB), with a conservative fallback.
    cap = 0
    try:
        cap = int(getattr(pltpu.get_tpu_info(), "vmem_capacity_bytes", 0))
    except Exception:
        cap = 0
    if cap <= 0:
        cap = 64 * 1024 * 1024
    return max(32 * 1024 * 1024, min(cap * 3 // 4, 100 * 1024 * 1024))


def _pad_masks(ksize, H, W):
    """(k*k, H*W) float masks: 1 where the shifted tap lands in-bounds."""
    pad = ksize // 2
    rr = np.arange(H)[:, None]
    cc = np.arange(W)[None, :]
    m = np.zeros((ksize * ksize, H * W), np.float32)
    for di in range(ksize):
        for dj in range(ksize):
            valid = ((rr + di - pad >= 0) & (rr + di - pad < H) &
                     (cc + dj - pad >= 0) & (cc + dj - pad < W))
            m[di * ksize + dj] = valid.astype(np.float32).reshape(-1)
    return m


def _stride_select(H, W, Ho, Wo, stride):
    """(H*W, Ho*Wo) 0/1 matrix selecting the strided output pixels."""
    s = np.zeros((H * W, Ho * Wo), np.float32)
    for ro in range(Ho):
        for co in range(Wo):
            s[(ro * stride) * W + co * stride, ro * Wo + co] = 1.0
    return s


# --------------------------- fused block kernel ------------------------------
def _make_block_kernel(*, ksize, stride, use_se, use_hs, has_shortcut, H, W):
    pad = ksize // 2
    HW = H * W
    Ho = (H + 2 * pad - ksize) // stride + 1
    Wo = (W + 2 * pad - ksize) // stride + 1
    HWo = Ho * Wo
    strided = stride > 1

    def act(v):
        if use_hs:  # h_swish(x) = x * relu6(x + 3) / 6
            return v * (jnp.clip(v + 3.0, 0.0, 6.0) * (1.0 / 6.0))
        return jnp.maximum(v, 0.0)

    def kernel(*refs):
        it = iter(refs)
        x_ref = next(it)                        # (Cin, HW)
        w1_ref, b1_ref = next(it), next(it)     # (Cexp, Cin), (Cexp, 1)
        wdw_ref, bdw_ref = next(it), next(it)   # (Cexp, k*k), (Cexp, 1)
        mask_ref = next(it)                     # (k*k, HW)
        sel_ref = next(it) if strided else None  # (HW, HWo)
        if use_se:
            wse1_ref, bse1_ref = next(it), next(it)  # (hid, Cexp), (hid, 1)
            wse2_ref, bse2_ref = next(it), next(it)  # (Cexp, hid), (Cexp, 1)
        w3_ref, b3_ref = next(it), next(it)     # (Coup, Cexp), (Coup, 1)
        if has_shortcut:
            wsc_ref, bsc_ref = next(it), next(it)    # (Coup, Cin), (Coup, 1)
        o_ref = next(it)                        # (Coup, HWo)

        x = x_ref[...].astype(jnp.float32)

        # ---- 1x1 expand conv + BN + act: lane-dense (Cexp, HW) --------------
        y = jnp.dot(w1_ref[...], x, preferred_element_type=jnp.float32)
        y = act(y + b1_ref[...])

        # ---- kxk depthwise conv + BN: lane rolls + precomputed pad masks ----
        acc = jnp.zeros_like(y)
        for di in range(ksize):
            for dj in range(ksize):
                t = di * ksize + dj
                off = (di - pad) * W + (dj - pad)
                shifted = pltpu.roll(y, shift=(-off) % HW, axis=1) if off != 0 else y
                acc = acc + shifted * (wdw_ref[:, t:t + 1] * mask_ref[t:t + 1, :])
        u = acc + bdw_ref[...]

        if strided:
            # In-kernel stride subsample: (Cexp, HW) @ (HW, HWo) selection.
            u = jnp.dot(u, sel_ref[...], preferred_element_type=jnp.float32)

        # ---- squeeze-excite: fused pool + lane-dense MLP ---------------------
        if use_se:
            hid = wse1_ref.shape[0]
            h = jnp.dot(wse1_ref[...], u, preferred_element_type=jnp.float32)
            h = jnp.sum(h, axis=1, keepdims=True) * (1.0 / HWo)  # == W1 @ mean(u)
            h = jnp.maximum(h + bse1_ref[...], 0.0)              # (hid, 1)
            h = jnp.zeros((hid, HWo), jnp.float32) + h           # lane broadcast
            s = jnp.dot(wse2_ref[...], h, preferred_element_type=jnp.float32)
            s = jnp.clip(s + bse2_ref[...] + 3.0, 0.0, 6.0) * (1.0 / 6.0)
            u = u * s

        t_mid = act(u)

        # ---- 1x1 project conv + BN + act ------------------------------------
        out = jnp.dot(w3_ref[...], t_mid, preferred_element_type=jnp.float32)
        out = act(out + b3_ref[...])

        # NOTE: the shortcut matmul cannot be merged with the projection
        # matmul because the module applies the final activation to the
        # projection output BEFORE adding the shortcut.
        if has_shortcut:
            out = out + jnp.dot(wsc_ref[...], x,
                                preferred_element_type=jnp.float32) + bsc_ref[...]

        o_ref[...] = out.astype(o_ref.dtype)

    return kernel


# ------------------------------- wrapper --------------------------------------
def inverted_residual_pallas(x, p, *, ksize, stride, use_se, use_hs):
    B, Cin, H, W = x.shape
    pad = ksize // 2
    HW = H * W
    Ho = (H + 2 * pad - ksize) // stride + 1
    Wo = (W + 2 * pad - ksize) // stride + 1
    HWo = Ho * Wo
    dtype = x.dtype
    has_shortcut = (stride == 1) and ('w_sc' in p)

    def fold_1x1(w4, g, b, m, v):
        s = g / jnp.sqrt(v + _BN_EPS)
        return ((w4[:, :, 0, 0] * s[:, None]).astype(jnp.float32),
                ((b - m * s)[:, None]).astype(jnp.float32))

    w1, b1 = fold_1x1(p['w1'], p['bn1_g'], p['bn1_b'], p['bn1_m'], p['bn1_v'])
    w3, b3 = fold_1x1(p['w3'], p['bn3_g'], p['bn3_b'], p['bn3_m'], p['bn3_v'])
    Cexp, Coup = w1.shape[0], w3.shape[0]

    s2 = p['bn2_g'] / jnp.sqrt(p['bn2_v'] + _BN_EPS)
    wdw = (p['w_dw'][:, 0] * s2[:, None, None]).reshape(Cexp, ksize * ksize)
    wdw = wdw.astype(jnp.float32)
    bdw = ((p['bn2_b'] - p['bn2_m'] * s2)[:, None]).astype(jnp.float32)

    # NCHW -> (B, Cin, H*W): contiguous trailing-dim merge, free in XLA.
    x3 = x.reshape(B, Cin, HW)

    args = [x3]
    in_specs = [pl.BlockSpec((None, Cin, HW), lambda b: (b, 0, 0))]

    def add(a):  # full-block 2D weight / constant (replicated across the grid)
        args.append(a)
        in_specs.append(pl.BlockSpec(a.shape, lambda b: (0, 0)))

    add(w1); add(b1); add(wdw); add(bdw)
    add(jnp.asarray(_pad_masks(ksize, H, W)))
    if stride > 1:
        add(jnp.asarray(_stride_select(H, W, Ho, Wo, stride)))
    if use_se:
        add(p['se_w1'].astype(jnp.float32))
        add(p['se_b1'][:, None].astype(jnp.float32))
        add(p['se_w2'].astype(jnp.float32))
        add(p['se_b2'][:, None].astype(jnp.float32))
    add(w3); add(b3)
    if has_shortcut:
        wsc, bsc = fold_1x1(p['w_sc'], p['bnsc_g'], p['bnsc_b'],
                            p['bnsc_m'], p['bnsc_v'])
        add(wsc); add(bsc)

    out = pl.pallas_call(
        _make_block_kernel(ksize=ksize, stride=stride, use_se=use_se,
                           use_hs=use_hs, has_shortcut=has_shortcut, H=H, W=W),
        out_shape=jax.ShapeDtypeStruct((B, Coup, HWo), dtype),
        grid_spec=pltpu.PrefetchScalarGridSpec(
            num_scalar_prefetch=0,
            grid=(B,),
            in_specs=in_specs,
            out_specs=pl.BlockSpec((None, Coup, HWo), lambda b: (b, 0, 0)),
        ),
        compiler_params=pltpu.CompilerParams(
            dimension_semantics=("parallel",),
            vmem_limit_bytes=_vmem_limit_bytes()),
    )(*args)
    return out.reshape(B, Coup, Ho, Wo)


# --------------------------- pure-JAX reference --------------------------------
def inverted_residual_ref(x, p, *, ksize, stride, use_se, use_hs):
    def bn(y, g, b, m, v):
        sc = (g / jnp.sqrt(v + _BN_EPS))[None, :, None, None]
        return (y - m[None, :, None, None]) * sc + b[None, :, None, None]

    def act(y):
        return y * jnp.clip(y + 3.0, 0.0, 6.0) / 6.0 if use_hs else jnp.maximum(y, 0.0)

    pad = ksize // 2
    y = jnp.einsum('oi,bihw->bohw', p['w1'][:, :, 0, 0], x)
    y = act(bn(y, p['bn1_g'], p['bn1_b'], p['bn1_m'], p['bn1_v']))

    B, C, H, W = y.shape
    yp = jnp.pad(y, ((0, 0), (0, 0), (pad, pad), (pad, pad)))
    Ho = (H + 2 * pad - ksize) // stride + 1
    Wo = (W + 2 * pad - ksize) // stride + 1
    dw = jnp.zeros((B, C, Ho, Wo), jnp.float32)
    for di in range(ksize):
        for dj in range(ksize):
            xs = yp[:, :, di:di + (Ho - 1) * stride + 1:stride,
                    dj:dj + (Wo - 1) * stride + 1:stride]
            dw = dw + xs * p['w_dw'][:, 0, di, dj][None, :, None, None]
    y = bn(dw, p['bn2_g'], p['bn2_b'], p['bn2_m'], p['bn2_v'])

    if use_se:
        pooled = jnp.mean(y, axis=(2, 3))
        h = jnp.maximum(pooled @ p['se_w1'].T + p['se_b1'], 0.0)
        s = jnp.clip(h @ p['se_w2'].T + p['se_b2'] + 3.0, 0.0, 6.0) / 6.0
        y = y * s[:, :, None, None]
    y = act(y)

    y = jnp.einsum('oi,bihw->bohw', p['w3'][:, :, 0, 0], y)
    y = act(bn(y, p['bn3_g'], p['bn3_b'], p['bn3_m'], p['bn3_v']))

    if 'w_sc' in p:
        sc = jnp.einsum('oi,bihw->bohw', p['w_sc'][:, :, 0, 0], x)
        sc = bn(sc, p['bnsc_g'], p['bnsc_b'], p['bnsc_m'], p['bnsc_v'])
        y = y + sc
    return y


# ------------------------------- param init ------------------------------------
def init_params(key, inp, expand, oup, ksize, use_se, has_shortcut):
    cnt = [0]

    def nk():
        cnt[0] += 1
        return jax.random.fold_in(key, cnt[0])

    def nrm(shape, s=0.1):
        return (s * jax.random.normal(nk(), shape)).astype(jnp.float32)

    def bn_params(c):
        return (1.0 + nrm((c,)), nrm((c,)), nrm((c,)),
                1.0 + 0.5 * jax.random.uniform(nk(), (c,), dtype=jnp.float32))

    p = {}
    p['w1'] = nrm((expand, inp, 1, 1))
    p['bn1_g'], p['bn1_b'], p['bn1_m'], p['bn1_v'] = bn_params(expand)
    p['w_dw'] = nrm((expand, 1, ksize, ksize), s=0.2)
    p['bn2_g'], p['bn2_b'], p['bn2_m'], p['bn2_v'] = bn_params(expand)
    if use_se:
        hid = _make_divisible(expand // 4, 8)
        p['se_w1'] = nrm((hid, expand))
        p['se_b1'] = nrm((hid,))
        p['se_w2'] = nrm((expand, hid))
        p['se_b2'] = nrm((expand,))
    p['w3'] = nrm((oup, expand, 1, 1))
    p['bn3_g'], p['bn3_b'], p['bn3_m'], p['bn3_v'] = bn_params(oup)
    if has_shortcut:
        p['w_sc'] = nrm((oup, inp, 1, 1))
        p['bnsc_g'], p['bnsc_b'], p['bnsc_m'], p['bnsc_v'] = bn_params(oup)
    return p


if __name__ == "__main__":
    key = jax.random.PRNGKey(0)

    # Config 1: stride-1 block with SE, h-swish, and residual shortcut.
    B, Cin, H, W = 2, 16, 16, 16
    expand, oup, ksize, stride = 64, 16, 3, 1
    kx, kp = jax.random.split(key)
    x = jax.random.normal(kx, (B, Cin, H, W), dtype=jnp.float32)
    params = init_params(kp, Cin, expand, oup, ksize, use_se=True,
                         has_shortcut=True)
    out = jax.block_until_ready(
        inverted_residual_pallas(x, params, ksize=ksize, stride=stride,
                                 use_se=True, use_hs=True))
    ref = inverted_residual_ref(x, params, ksize=ksize, stride=stride,
                                use_se=True, use_hs=True)
    assert out.shape == (B, oup, H, W)
    assert jnp.allclose(out, ref, atol=1e-3, rtol=1e-3), \
        f"config1 mismatch, max abs diff = {jnp.max(jnp.abs(out - ref))}"

    # Config 2: stride-2 block, ReLU, no SE, no shortcut.
    B2, Cin2, H2, W2 = 2, 8, 16, 16
    expand2, oup2, ks2, stride2 = 24, 12, 3, 2
    kx2, kp2 = jax.random.split(jax.random.fold_in(key, 7))
    x2 = jax.random.normal(kx2, (B2, Cin2, H2, W2), dtype=jnp.float32)
    params2 = init_params(kp2, Cin2, expand2, oup2, ks2, use_se=False,
                          has_shortcut=False)
    out2 = jax.block_until_ready(
        inverted_residual_pallas(x2, params2, ksize=ks2, stride=stride2,
                                 use_se=False, use_hs=False))
    ref2 = inverted_residual_ref(x2, params2, ksize=ks2, stride=stride2,
                                 use_se=False, use_hs=False)
    assert out2.shape == (B2, oup2, H2 // 2, W2 // 2)
    assert jnp.allclose(out2, ref2, atol=1e-3, rtol=1e-3), \
        f"config2 mismatch, max abs diff = {jnp.max(jnp.abs(out2 - ref2))}"

    print("KERNEL_OK")
</pallas_src>

<mosaic_0001>
module attributes {stable_mosaic.version = 11 : i64} {
  func.func @kernel(%arg0: i32, %arg1: memref<1x16x256xf32, #tpu.memory_space<vmem>>, %arg2: memref<64x16xf32, #tpu.memory_space<vmem>>, %arg3: memref<64x1xf32, #tpu.memory_space<vmem>>, %arg4: memref<64x9xf32, #tpu.memory_space<vmem>>, %arg5: memref<64x1xf32, #tpu.memory_space<vmem>>, %arg6: memref<9x256xf32, #tpu.memory_space<vmem>>, %arg7: memref<16x64xf32, #tpu.memory_space<vmem>>, %arg8: memref<16x1xf32, #tpu.memory_space<vmem>>, %arg9: memref<64x16xf32, #tpu.memory_space<vmem>>, %arg10: memref<64x1xf32, #tpu.memory_space<vmem>>, %arg11: memref<16x64xf32, #tpu.memory_space<vmem>>, %arg12: memref<16x1xf32, #tpu.memory_space<vmem>>, %arg13: memref<16x16xf32, #tpu.memory_space<vmem>>, %arg14: memref<16x1xf32, #tpu.memory_space<vmem>>, %arg15: memref<1x16x256xf32, #tpu.memory_space<vmem>>) attributes {dimension_semantics = [#tpu.dimension_semantics<parallel>], iteration_bounds = array<i64: 2>, scalar_prefetch = 0 : i64, scratch_operands = 0 : i64, tpu.core_type = #tpu.core_type<tc>, window_params = [{transform_indices = @transform_0, window_bounds = array<i64: 1, 16, 256>}, {pipeline_mode = #tpu.pipeline_mode<synchronous>, transform_indices = @transform_1, window_bounds = array<i64: 64, 16>}, {pipeline_mode = #tpu.pipeline_mode<synchronous>, transform_indices = @transform_2, window_bounds = array<i64: 64, 1>}, {pipeline_mode = #tpu.pipeline_mode<synchronous>, transform_indices = @transform_3, window_bounds = array<i64: 64, 9>}, {pipeline_mode = #tpu.pipeline_mode<synchronous>, transform_indices = @transform_4, window_bounds = array<i64: 64, 1>}, {pipeline_mode = #tpu.pipeline_mode<synchronous>, transform_indices = @transform_5, window_bounds = array<i64: 9, 256>}, {pipeline_mode = #tpu.pipeline_mode<synchronous>, transform_indices = @transform_6, window_bounds = array<i64: 16, 64>}, {pipeline_mode = #tpu.pipeline_mode<synchronous>, transform_indices = @transform_7, window_bounds = array<i64: 16, 1>}, {pipeline_mode = #tpu.pipeline_mode<synchronous>, transform_indices = @transform_8, window_bounds = array<i64: 64, 16>}, {pipeline_mode = #tpu.pipeline_mode<synchronous>, transform_indices = @transform_9, window_bounds = array<i64: 64, 1>}, {pipeline_mode = #tpu.pipeline_mode<synchronous>, transform_indices = @transform_10, window_bounds = array<i64: 16, 64>}, {pipeline_mode = #tpu.pipeline_mode<synchronous>, transform_indices = @transform_11, window_bounds = array<i64: 16, 1>}, {pipeline_mode = #tpu.pipeline_mode<synchronous>, transform_indices = @transform_12, window_bounds = array<i64: 16, 16>}, {pipeline_mode = #tpu.pipeline_mode<synchronous>, transform_indices = @transform_13, window_bounds = array<i64: 16, 1>}, {transform_indices = @transform_14, window_bounds = array<i64: 1, 16, 256>}]} {
    %c0 = arith.constant 0 : index
    %c0_0 = arith.constant 0 : index
    %c0_1 = arith.constant 0 : index
    %0 = vector.load %arg1[%c0, %c0_0, %c0_1] : memref<1x16x256xf32, #tpu.memory_space<vmem>>, vector<1x16x256xf32>
    %1 = vector.shape_cast %0 : vector<1x16x256xf32> to vector<16x256xf32>
    %c0_2 = arith.constant 0 : index
    %c0_3 = arith.constant 0 : index
    %2 = vector.load %arg2[%c0_2, %c0_3] : memref<64x16xf32, #tpu.memory_space<vmem>>, vector<64x16xf32>
    %cst = arith.constant dense<0.000000e+00> : vector<64x256xf32>
    %3 = tpu.matmul %2, %1, %cst {dimension_numbers = #tpu.dot_dimension_numbers<[1], [0], [0], [1], [0, 0, 1, 1], [], []>} : vector<64x16xf32>, vector<16x256xf32>, vector<64x256xf32> -> vector<64x256xf32>
    %c0_4 = arith.constant 0 : index
    %c0_5 = arith.constant 0 : index
    %4 = vector.load %arg3[%c0_4, %c0_5] : memref<64x1xf32, #tpu.memory_space<vmem>>, vector<64x1xf32>
    %5 = vector.broadcast %4 : vector<64x1xf32> to vector<64x256xf32>
    %6 = arith.addf %3, %5 : vector<64x256xf32>
    %cst_6 = arith.constant 3.000000e+00 : f32
    %7 = vector.broadcast %cst_6 : f32 to vector<64x256xf32>
    %8 = arith.addf %6, %7 : vector<64x256xf32>
    %cst_7 = arith.constant 0.000000e+00 : f32
    %cst_8 = arith.constant 6.000000e+00 : f32
    %9 = vector.broadcast %cst_7 : f32 to vector<64x256xf32>
    %10 = arith.maximumf %9, %8 : vector<64x256xf32>
    %11 = vector.broadcast %cst_8 : f32 to vector<64x256xf32>
    %12 = arith.minimumf %11, %10 : vector<64x256xf32>
    %cst_9 = arith.constant 0.166666672 : f32
    %13 = vector.broadcast %cst_9 : f32 to vector<64x256xf32>
    %14 = arith.mulf %12, %13 : vector<64x256xf32>
    %15 = arith.mulf %6, %14 : vector<64x256xf32>
    %cst_10 = arith.constant 0.000000e+00 : f32
    %16 = vector.broadcast %cst_10 : f32 to vector<64x256xf32>
    %c17_i32 = arith.constant 17 : i32
    %17 = tpu.dynamic_rotate %15 by %c17_i32 dim 1 : vector<64x256xf32>, i32 -> vector<64x256xf32>
    %c0_11 = arith.constant 0 : index
    %c0_12 = arith.constant 0 : index
    %18 = vector.load %arg4[%c0_11, %c0_12] : memref<64x9xf32, #tpu.memory_space<vmem>>, vector<64x1xf32>
    %c0_13 = arith.constant 0 : index
    %c0_14 = arith.constant 0 : index
    %19 = vector.load %arg6[%c0_13, %c0_14] : memref<9x256xf32, #tpu.memory_space<vmem>>, vector<1x256xf32>
    %20 = vector.broadcast %18 : vector<64x1xf32> to vector<64x256xf32>
    %21 = vector.broadcast %19 : vector<1x256xf32> to vector<64x256xf32>
    %22 = arith.mulf %20, %21 : vector<64x256xf32>
    %23 = arith.mulf %17, %22 : vector<64x256xf32>
    %24 = arith.addf %16, %23 : vector<64x256xf32>
    %c16_i32 = arith.constant 16 : i32
    %25 = tpu.dynamic_rotate %15 by %c16_i32 dim 1 : vector<64x256xf32>, i32 -> vector<64x256xf32>
    %c0_15 = arith.constant 0 : index
    %c1 = arith.constant 1 : index
    %26 = vector.load %arg4[%c0_15, %c1] : memref<64x9xf32, #tpu.memory_space<vmem>>, vector<64x1xf32>
    %c1_16 = arith.constant 1 : index
    %c0_17 = arith.constant 0 : index
    %27 = vector.load %arg6[%c1_16, %c0_17] : memref<9x256xf32, #tpu.memory_space<vmem>>, vector<1x256xf32>
    %28 = vector.broadcast %26 : vector<64x1xf32> to vector<64x256xf32>
    %29 = vector.broadcast %27 : vector<1x256xf32> to vector<64x256xf32>
    %30 = arith.mulf %28, %29 : vector<64x256xf32>
    %31 = arith.mulf %25, %30 : vector<64x256xf32>
    %32 = arith.addf %24, %31 : vector<64x256xf32>
    %c15_i32 = arith.constant 15 : i32
    %33 = tpu.dynamic_rotate %15 by %c15_i32 dim 1 : vector<64x256xf32>, i32 -> vector<64x256xf32>
    %c0_18 = arith.constant 0 : index
    %c2 = arith.constant 2 : index
    %34 = vector.load %arg4[%c0_18, %c2] : memref<64x9xf32, #tpu.memory_space<vmem>>, vector<64x1xf32>
    %c2_19 = arith.constant 2 : index
    %c0_20 = arith.constant 0 : index
    %35 = vector.load %arg6[%c2_19, %c0_20] : memref<9x256xf32, #tpu.memory_space<vmem>>, vector<1x256xf32>
    %36 = vector.broadcast %34 : vector<64x1xf32> to vector<64x256xf32>
    %37 = vector.broadcast %35 : vector<1x256xf32> to vector<64x256xf32>
    %38 = arith.mulf %36, %37 : vector<64x256xf32>
    %39 = arith.mulf %33, %38 : vector<64x256xf32>
    %40 = arith.addf %32, %39 : vector<64x256xf32>
    %c1_i32 = arith.constant 1 : i32
    %41 = tpu.dynamic_rotate %15 by %c1_i32 dim 1 : vector<64x256xf32>, i32 -> vector<64x256xf32>
    %c0_21 = arith.constant 0 : index
    %c3 = arith.constant 3 : index
    %42 = vector.load %arg4[%c0_21, %c3] : memref<64x9xf32, #tpu.memory_space<vmem>>, vector<64x1xf32>
    %c3_22 = arith.constant 3 : index
    %c0_23 = arith.constant 0 : index
    %43 = vector.load %arg6[%c3_22, %c0_23] : memref<9x256xf32, #tpu.memory_space<vmem>>, vector<1x256xf32>
    %44 = vector.broadcast %42 : vector<64x1xf32> to vector<64x256xf32>
    %45 = vector.broadcast %43 : vector<1x256xf32> to vector<64x256xf32>
    %46 = arith.mulf %44, %45 : vector<64x256xf32>
    %47 = arith.mulf %41, %46 : vector<64x256xf32>
    %48 = arith.addf %40, %47 : vector<64x256xf32>
    %c0_24 = arith.constant 0 : index
    %c4 = arith.constant 4 : index
    %49 = vector.load %arg4[%c0_24, %c4] : memref<64x9xf32, #tpu.memory_space<vmem>>, vector<64x1xf32>
    %c4_25 = arith.constant 4 : index
    %c0_26 = arith.constant 0 : index
    %50 = vector.load %arg6[%c4_25, %c0_26] : memref<9x256xf32, #tpu.memory_space<vmem>>, vector<1x256xf32>
    %51 = vector.broadcast %49 : vector<64x1xf32> to vector<64x256xf32>
    %52 = vector.broadcast %50 : vector<1x256xf32> to vector<64x256xf32>
    %53 = arith.mulf %51, %52 : vector<64x256xf32>
    %54 = arith.mulf %15, %53 : vector<64x256xf32>
    %55 = arith.addf %48, %54 : vector<64x256xf32>
    %c255_i32 = arith.constant 255 : i32
    %56 = tpu.dynamic_rotate %15 by %c255_i32 dim 1 : vector<64x256xf32>, i32 -> vector<64x256xf32>
    %c0_27 = arith.constant 0 : index
    %c5 = arith.constant 5 : index
    %57 = vector.load %arg4[%c0_27, %c5] : memref<64x9xf32, #tpu.memory_space<vmem>>, vector<64x1xf32>
    %c5_28 = arith.constant 5 : index
    %c0_29 = arith.constant 0 : index
    %58 = vector.load %arg6[%c5_28, %c0_29] : memref<9x256xf32, #tpu.memory_space<vmem>>, vector<1x256xf32>
    %59 = vector.broadcast %57 : vector<64x1xf32> to vector<64x256xf32>
    %60 = vector.broadcast %58 : vector<1x256xf32> to vector<64x256xf32>
    %61 = arith.mulf %59, %60 : vector<64x256xf32>
    %62 = arith.mulf %56, %61 : vector<64x256xf32>
    %63 = arith.addf %55, %62 : vector<64x256xf32>
    %c241_i32 = arith.constant 241 : i32
    %64 = tpu.dynamic_rotate %15 by %c241_i32 dim 1 : vector<64x256xf32>, i32 -> vector<64x256xf32>
    %c0_30 = arith.constant 0 : index
    %c6 = arith.constant 6 : index
    %65 = vector.load %arg4[%c0_30, %c6] : memref<64x9xf32, #tpu.memory_space<vmem>>, vector<64x1xf32>
    %c6_31 = arith.constant 6 : index
    %c0_32 = arith.constant 0 : index
    %66 = vector.load %arg6[%c6_31, %c0_32] : memref<9x256xf32, #tpu.memory_space<vmem>>, vector<1x256xf32>
    %67 = vector.broadcast %65 : vector<64x1xf32> to vector<64x256xf32>
    %68 = vector.broadcast %66 : vector<1x256xf32> to vector<64x256xf32>
    %69 = arith.mulf %67, %68 : vector<64x256xf32>
    %70 = arith.mulf %64, %69 : vector<64x256xf32>
    %71 = arith.addf %63, %70 : vector<64x256xf32>
    %c240_i32 = arith.constant 240 : i32
    %72 = tpu.dynamic_rotate %15 by %c240_i32 dim 1 : vector<64x256xf32>, i32 -> vector<64x256xf32>
    %c0_33 = arith.constant 0 : index
    %c7 = arith.constant 7 : index
    %73 = vector.load %arg4[%c0_33, %c7] : memref<64x9xf32, #tpu.memory_space<vmem>>, vector<64x1xf32>
    %c7_34 = arith.constant 7 : index
    %c0_35 = arith.constant 0 : index
    %74 = vector.load %arg6[%c7_34, %c0_35] : memref<9x256xf32, #tpu.memory_space<vmem>>, vector<1x256xf32>
    %75 = vector.broadcast %73 : vector<64x1xf32> to vector<64x256xf32>
    %76 = vector.broadcast %74 : vector<1x256xf32> to vector<64x256xf32>
    %77 = arith.mulf %75, %76 : vector<64x256xf32>
    %78 = arith.mulf %72, %77 : vector<64x256xf32>
    %79 = arith.addf %71, %78 : vector<64x256xf32>
    %c239_i32 = arith.constant 239 : i32
    %80 = tpu.dynamic_rotate %15 by %c239_i32 dim 1 : vector<64x256xf32>, i32 -> vector<64x256xf32>
    %c0_36 = arith.constant 0 : index
    %c8 = arith.constant 8 : index
    %81 = vector.load %arg4[%c0_36, %c8] : memref<64x9xf32, #tpu.memory_space<vmem>>, vector<64x1xf32>
    %c8_37 = arith.constant 8 : index
    %c0_38 = arith.constant 0 : index
    %82 = vector.load %arg6[%c8_37, %c0_38] : memref<9x256xf32, #tpu.memory_space<vmem>>, vector<1x256xf32>
    %83 = vector.broadcast %81 : vector<64x1xf32> to vector<64x256xf32>
    %84 = vector.broadcast %82 : vector<1x256xf32> to vector<64x256xf32>
    %85 = arith.mulf %83, %84 : vector<64x256xf32>
    %86 = arith.mulf %80, %85 : vector<64x256xf32>
    %87 = arith.addf %79, %86 : vector<64x256xf32>
    %c0_39 = arith.constant 0 : index
    %c0_40 = arith.constant 0 : index
    %88 = vector.load %arg5[%c0_39, %c0_40] : memref<64x1xf32, #tpu.memory_space<vmem>>, vector<64x1xf32>
    %89 = vector.broadcast %88 : vector<64x1xf32> to vector<64x256xf32>
    %90 = arith.addf %87, %89 : vector<64x256xf32>
    %c0_41 = arith.constant 0 : index
    %c0_42 = arith.constant 0 : index
    %91 = vector.load %arg7[%c0_41, %c0_42] : memref<16x64xf32, #tpu.memory_space<vmem>>, vector<16x64xf32>
    %cst_43 = arith.constant dense<0.000000e+00> : vector<16x256xf32>
    %92 = tpu.matmul %91, %90, %cst_43 {dimension_numbers = #tpu.dot_dimension_numbers<[1], [0], [0], [1], [0, 0, 1, 1], [], []>} : vector<16x64xf32>, vector<64x256xf32>, vector<16x256xf32> -> vector<16x256xf32>
    %cst_44 = arith.constant dense<0.000000e+00> : vector<16xf32>
    %93 = vector.multi_reduction <add>, %92, %cst_44 [1] : vector<16x256xf32> to vector<16xf32>
    %94 = vector.shape_cast %93 : vector<16xf32> to vector<16x1xf32>
    %cst_45 = arith.constant 3.906250e-03 : f32
    %95 = vector.broadcast %cst_45 : f32 to vector<16x1xf32>
    %96 = arith.mulf %94, %95 : vector<16x1xf32>
    %c0_46 = arith.constant 0 : index
    %c0_47 = arith.constant 0 : index
    %97 = vector.load %arg8[%c0_46, %c0_47] : memref<16x1xf32, #tpu.memory_space<vmem>>, vector<16x1xf32>
    %98 = arith.addf %96, %97 : vector<16x1xf32>
    %cst_48 = arith.constant 0.000000e+00 : f32
    %99 = vector.broadcast %cst_48 : f32 to vector<16x1xf32>
    %100 = arith.maximumf %98, %99 : vector<16x1xf32>
    %cst_49 = arith.constant 0.000000e+00 : f32
    %101 = vector.broadcast %cst_49 : f32 to vector<16x256xf32>
    %102 = vector.broadcast %100 : vector<16x1xf32> to vector<16x256xf32>
    %103 = arith.addf %101, %102 : vector<16x256xf32>
    %c0_50 = arith.constant 0 : index
    %c0_51 = arith.constant 0 : index
    %104 = vector.load %arg9[%c0_50, %c0_51] : memref<64x16xf32, #tpu.memory_space<vmem>>, vector<64x16xf32>
    %cst_52 = arith.constant dense<0.000000e+00> : vector<64x256xf32>
    %105 = tpu.matmul %104, %103, %cst_52 {dimension_numbers = #tpu.dot_dimension_numbers<[1], [0], [0], [1], [0, 0, 1, 1], [], []>} : vector<64x16xf32>, vector<16x256xf32>, vector<64x256xf32> -> vector<64x256xf32>
    %c0_53 = arith.constant 0 : index
    %c0_54 = arith.constant 0 : index
    %106 = vector.load %arg10[%c0_53, %c0_54] : memref<64x1xf32, #tpu.memory_space<vmem>>, vector<64x1xf32>
    %107 = vector.broadcast %106 : vector<64x1xf32> to vector<64x256xf32>
    %108 = arith.addf %105, %107 : vector<64x256xf32>
    %cst_55 = arith.constant 3.000000e+00 : f32
    %109 = vector.broadcast %cst_55 : f32 to vector<64x256xf32>
    %110 = arith.addf %108, %109 : vector<64x256xf32>
    %cst_56 = arith.constant 0.000000e+00 : f32
    %cst_57 = arith.constant 6.000000e+00 : f32
    %111 = vector.broadcast %cst_56 : f32 to vector<64x256xf32>
    %112 = arith.maximumf %111, %110 : vector<64x256xf32>
    %113 = vector.broadcast %cst_57 : f32 to vector<64x256xf32>
    %114 = arith.minimumf %113, %112 : vector<64x256xf32>
    %cst_58 = arith.constant 0.166666672 : f32
    %115 = vector.broadcast %cst_58 : f32 to vector<64x256xf32>
    %116 = arith.mulf %114, %115 : vector<64x256xf32>
    %117 = arith.mulf %90, %116 : vector<64x256xf32>
    %cst_59 = arith.constant 3.000000e+00 : f32
    %118 = vector.broadcast %cst_59 : f32 to vector<64x256xf32>
    %119 = arith.addf %117, %118 : vector<64x256xf32>
    %cst_60 = arith.constant 0.000000e+00 : f32
    %cst_61 = arith.constant 6.000000e+00 : f32
    %120 = vector.broadcast %cst_60 : f32 to vector<64x256xf32>
    %121 = arith.maximumf %120, %119 : vector<64x256xf32>
    %122 = vector.broadcast %cst_61 : f32 to vector<64x256xf32>
    %123 = arith.minimumf %122, %121 : vector<64x256xf32>
    %cst_62 = arith.constant 0.166666672 : f32
    %124 = vector.broadcast %cst_62 : f32 to vector<64x256xf32>
    %125 = arith.mulf %123, %124 : vector<64x256xf32>
    %126 = arith.mulf %117, %125 : vector<64x256xf32>
    %c0_63 = arith.constant 0 : index
    %c0_64 = arith.constant 0 : index
    %127 = vector.load %arg11[%c0_63, %c0_64] : memref<16x64xf32, #tpu.memory_space<vmem>>, vector<16x64xf32>
    %cst_65 = arith.constant dense<0.000000e+00> : vector<16x256xf32>
    %128 = tpu.matmul %127, %126, %cst_65 {dimension_numbers = #tpu.dot_dimension_numbers<[1], [0], [0], [1], [0, 0, 1, 1], [], []>} : vector<16x64xf32>, vector<64x256xf32>, vector<16x256xf32> -> vector<16x256xf32>
    %c0_66 = arith.constant 0 : index
    %c0_67 = arith.constant 0 : index
    %129 = vector.load %arg12[%c0_66, %c0_67] : memref<16x1xf32, #tpu.memory_space<vmem>>, vector<16x1xf32>
    %130 = vector.broadcast %129 : vector<16x1xf32> to vector<16x256xf32>
    %131 = arith.addf %128, %130 : vector<16x256xf32>
    %cst_68 = arith.constant 3.000000e+00 : f32
    %132 = vector.broadcast %cst_68 : f32 to vector<16x256xf32>
    %133 = arith.addf %131, %132 : vector<16x256xf32>
    %cst_69 = arith.constant 0.000000e+00 : f32
    %cst_70 = arith.constant 6.000000e+00 : f32
    %134 = vector.broadcast %cst_69 : f32 to vector<16x256xf32>
    %135 = arith.maximumf %134, %133 : vector<16x256xf32>
    %136 = vector.broadcast %cst_70 : f32 to vector<16x256xf32>
    %137 = arith.minimumf %136, %135 : vector<16x256xf32>
    %cst_71 = arith.constant 0.166666672 : f32
    %138 = vector.broadcast %cst_71 : f32 to vector<16x256xf32>
    %139 = arith.mulf %137, %138 : vector<16x256xf32>
    %140 = arith.mulf %131, %139 : vector<16x256xf32>
    %c0_72 = arith.constant 0 : index
    %c0_73 = arith.constant 0 : index
    %141 = vector.load %arg13[%c0_72, %c0_73] : memref<16x16xf32, #tpu.memory_space<vmem>>, vector<16x16xf32>
    %cst_74 = arith.constant dense<0.000000e+00> : vector<16x256xf32>
    %142 = tpu.matmul %141, %1, %cst_74 {dimension_numbers = #tpu.dot_dimension_numbers<[1], [0], [0], [1], [0, 0, 1, 1], [], []>} : vector<16x16xf32>, vector<16x256xf32>, vector<16x256xf32> -> vector<16x256xf32>
    %143 = arith.addf %140, %142 : vector<16x256xf32>
    %c0_75 = arith.constant 0 : index
    %c0_76 = arith.constant 0 : index
    %144 = vector.load %arg14[%c0_75, %c0_76] : memref<16x1xf32, #tpu.memory_space<vmem>>, vector<16x1xf32>
    %145 = vector.broadcast %144 : vector<16x1xf32> to vector<16x256xf32>
    %146 = arith.addf %143, %145 : vector<16x256xf32>
    %c0_77 = arith.constant 0 : index
    %c0_78 = arith.constant 0 : index
    %c0_79 = arith.constant 0 : index
    %147 = vector.load %arg15[%c0_77, %c0_78, %c0_79] : memref<1x16x256xf32, #tpu.memory_space<vmem>>, vector<1x16x256xf32>
    %148 = vector.shape_cast %147 : vector<1x16x256xf32> to vector<16x256xf32>
    %149 = vector.shape_cast %146 : vector<16x256xf32> to vector<1x16x256xf32>
    tpu.vector_store %arg15[%c0_77, %c0_78, %c0_79], %149 {strides = array<i32>} : memref<1x16x256xf32, #tpu.memory_space<vmem>>, vector<1x16x256xf32>,
    return
  }
  func.func @transform_0(%arg0: i32) -> (i32, i32, i32) {
    %c0_i32 = arith.constant 0 : i32
    %c0_i32_0 = arith.constant 0 : i32
    %c0_i32_1 = arith.constant 0 : i32
    return %arg0, %c0_i32, %c0_i32_0 : i32, i32, i32
  }
  func.func @transform_1(%arg0: i32) -> (i32, i32) {
    %c0_i32 = arith.constant 0 : i32
    %c0_i32_0 = arith.constant 0 : i32
    %c0_i32_1 = arith.constant 0 : i32
    return %c0_i32, %c0_i32_0 : i32, i32
  }
  func.func @transform_2(%arg0: i32) -> (i32, i32) {
    %c0_i32 = arith.constant 0 : i32
    %c0_i32_0 = arith.constant 0 : i32
    %c0_i32_1 = arith.constant 0 : i32
    return %c0_i32, %c0_i32_0 : i32, i32
  }
  func.func @transform_3(%arg0: i32) -> (i32, i32) {
    %c0_i32 = arith.constant 0 : i32
    %c0_i32_0 = arith.constant 0 : i32
    %c0_i32_1 = arith.constant 0 : i32
    return %c0_i32, %c0_i32_0 : i32, i32
  }
  func.func @transform_4(%arg0: i32) -> (i32, i32) {
    %c0_i32 = arith.constant 0 : i32
    %c0_i32_0 = arith.constant 0 : i32
    %c0_i32_1 = arith.constant 0 : i32
    return %c0_i32, %c0_i32_0 : i32, i32
  }
  func.func @transform_5(%arg0: i32) -> (i32, i32) {
    %c0_i32 = arith.constant 0 : i32
    %c0_i32_0 = arith.constant 0 : i32
    %c0_i32_1 = arith.constant 0 : i32
    return %c0_i32, %c0_i32_0 : i32, i32
  }
  func.func @transform_6(%arg0: i32) -> (i32, i32) {
    %c0_i32 = arith.constant 0 : i32
    %c0_i32_0 = arith.constant 0 : i32
    %c0_i32_1 = arith.constant 0 : i32
    return %c0_i32, %c0_i32_0 : i32, i32
  }
  func.func @transform_7(%arg0: i32) -> (i32, i32) {
    %c0_i32 = arith.constant 0 : i32
    %c0_i32_0 = arith.constant 0 : i32
    %c0_i32_1 = arith.constant 0 : i32
    return %c0_i32, %c0_i32_0 : i32, i32
  }
  func.func @transform_8(%arg0: i32) -> (i32, i32) {
    %c0_i32 = arith.constant 0 : i32
    %c0_i32_0 = arith.constant 0 : i32
    %c0_i32_1 = arith.constant 0 : i32
    return %c0_i32, %c0_i32_0 : i32, i32
  }
  func.func @transform_9(%arg0: i32) -> (i32, i32) {
    %c0_i32 = arith.constant 0 : i32
    %c0_i32_0 = arith.constant 0 : i32
    %c0_i32_1 = arith.constant 0 : i32
    return %c0_i32, %c0_i32_0 : i32, i32
  }
  func.func @transform_10(%arg0: i32) -> (i32, i32) {
    %c0_i32 = arith.constant 0 : i32
    %c0_i32_0 = arith.constant 0 : i32
    %c0_i32_1 = arith.constant 0 : i32
    return %c0_i32, %c0_i32_0 : i32, i32
  }
  func.func @transform_11(%arg0: i32) -> (i32, i32) {
    %c0_i32 = arith.constant 0 : i32
    %c0_i32_0 = arith.constant 0 : i32
    %c0_i32_1 = arith.constant 0 : i32
    return %c0_i32, %c0_i32_0 : i32, i32
  }
  func.func @transform_12(%arg0: i32) -> (i32, i32) {
    %c0_i32 = arith.constant 0 : i32
    %c0_i32_0 = arith.constant 0 : i32
    %c0_i32_1 = arith.constant 0 : i32
    return %c0_i32, %c0_i32_0 : i32, i32
  }
  func.func @transform_13(%arg0: i32) -> (i32, i32) {
    %c0_i32 = arith.constant 0 : i32
    %c0_i32_0 = arith.constant 0 : i32
    %c0_i32_1 = arith.constant 0 : i32
    return %c0_i32, %c0_i32_0 : i32, i32
  }
  func.func @transform_14(%arg0: i32) -> (i32, i32, i32) {
    %c0_i32 = arith.constant 0 : i32
    %c0_i32_0 = arith.constant 0 : i32
    %c0_i32_1 = arith.constant 0 : i32
    return %arg0, %c0_i32, %c0_i32_0 : i32, i32, i32
  }
}

</mosaic_0001>

<llo_original>
// kernel: tpu_custom_call.1
$region0: #{tpu_custom_call.1}
  #allocation0 [shape = 'u32[]', space=smem, size = 0x4, offset = 0x4, fixed_abs, tag = 'smem constant byte address 0x4 - core index']
  #allocation1 [shape = 'u32[72,128]{1,0:T(1,128)}', space=vmem, size = 0x9000, scoped, tag = 'internal scratch']
  %s0 = inlined_call_operand.vmem [shape: f32[2,16,256], index: 0, kind: input, shape index: {}]
  %s1 = inlined_call_operand.vmem [shape: f32[64,16], index: 1, kind: input, shape index: {}]
  %s2 = inlined_call_operand.vmem [shape: f32[64,1], index: 2, kind: input, shape index: {}]
  %s3 = inlined_call_operand.vmem [shape: f32[64,9], index: 3, kind: input, shape index: {}]
  %s4 = inlined_call_operand.vmem [shape: f32[64,1], index: 4, kind: input, shape index: {}]
  %s5 = inlined_call_operand.vmem [shape: f32[9,256], index: 5, kind: input, shape index: {}]
  %s6 = inlined_call_operand.vmem [shape: f32[16,64], index: 6, kind: input, shape index: {}]
  %s7 = inlined_call_operand.vmem [shape: f32[16,1], index: 7, kind: input, shape index: {}]
  %s8 = inlined_call_operand.vmem [shape: f32[64,16], index: 8, kind: input, shape index: {}]
  %s9 = inlined_call_operand.vmem [shape: f32[64,1], index: 9, kind: input, shape index: {}]
  %s10 = inlined_call_operand.vmem [shape: f32[16,64], index: 10, kind: input, shape index: {}]
  %s11 = inlined_call_operand.vmem [shape: f32[16,1], index: 11, kind: input, shape index: {}]
  %s12 = inlined_call_operand.vmem [shape: f32[16,16], index: 12, kind: input, shape index: {}]
  %s13 = inlined_call_operand.vmem [shape: f32[16,1], index: 13, kind: input, shape index: {}]
  %s14 = inlined_call_operand.hbm [shape: f32[2,16,256], index: 14, kind: output, shape index: {}]
  %s15 = sld [smem:[#allocation0]]
  $region89: #{tpu_custom_call.1} parent=0
    _
  %s17 = ssub.s32 1, %s15
  %s18 = scalar_select 0, %s17, %s15
  $region1: #{tpu_custom_call.1} parent=0
    #allocation2 [shape = 'u8[32768]{0}', space=vmem, size = 0x8000, scoped, tag = 'output window, operand 0']
    #allocation3 [shape = 's32[2]{0}', space=sflag, size = 0x8, scoped, tag = 'scoped memory for tpu_custom_call.1']
    %19 = vsyncpa [#allocation3], 0
    %s20 = scalar_lea.sflag [#allocation3], 1
    %21 = vsyncpa %s20, 0
    loop: start=0, step=1, limit=4
    $region2: #{tpu_custom_call.1} parent=1 // loop_pre_header
      _
    $region3: #{tpu_custom_call.1} parent=1 // loop_header
      %s23 = sphi 0, %s27
      %p24 = scmp.ge.s32.totalorder %s23, 4
      %s33 = sphi 0, %s35
      %s36 = sphi 0, %s33
      %s37 = sphi 0, %s36
      %s53 = sphi 0, %s37
      %s57 = sphi 0, %s57
      %s59 = sphi 0, %s57
      %s60 = sphi 0, %s59
      %s74 = sphi 0, %s60
      %s78 = sphi 0, %s78
      %s80 = sphi 0, %s78
      %s81 = sphi 0, %s80
      %s95 = sphi 0, %s81
      %s99 = sphi 0, %s99
      %s101 = sphi 0, %s99
      %s102 = sphi 0, %s101
      %s116 = sphi 0, %s102
      %s120 = sphi 0, %s120
      %s122 = sphi 0, %s120
      %s123 = sphi 0, %s122
      %s137 = sphi 0, %s123
      %s141 = sphi 0, %s141
      %s143 = sphi 0, %s141
      %s144 = sphi 0, %s143
      %s158 = sphi 0, %s144
      %s162 = sphi 0, %s162
      %s164 = sphi 0, %s162
      %s165 = sphi 0, %s164
      %s179 = sphi 0, %s165
      %s183 = sphi 0, %s183
      %s185 = sphi 0, %s183
      %s186 = sphi 0, %s185
      %s200 = sphi 0, %s186
      %s204 = sphi 0, %s204
      %s206 = sphi 0, %s204
      %s207 = sphi 0, %s206
      %s221 = sphi 0, %s207
      %s225 = sphi 0, %s225
      %s227 = sphi 0, %s225
      %s228 = sphi 0, %s227
      %s242 = sphi 0, %s228
      %s246 = sphi 0, %s246
      %s248 = sphi 0, %s246
      %s249 = sphi 0, %s248
      %s263 = sphi 0, %s249
      %s267 = sphi 0, %s267
      %s269 = sphi 0, %s267
      %s270 = sphi 0, %s269
      %s284 = sphi 0, %s270
      %s288 = sphi 0, %s288
      %s290 = sphi 0, %s288
      %s291 = sphi 0, %s290
      %s305 = sphi 0, %s291
      %s309 = sphi 0, %s309
      %s311 = sphi 0, %s309
      %s312 = sphi 0, %s311
      %s326 = sphi 0, %s312
      %s332 = sphi 0, %s334
      %s335 = sphi 0, %s332
      %s336 = sphi 0, %s335
      %s352 = sphi 0, %s336
    $region4: #{tpu_custom_call.1} parent=1 // loop_header_branch
      %26 = sbr.rel (%p24) target = $region8
    $region5: #{tpu_custom_call.1} parent=1 // loop_body
      %s28 = ssub.s32 %s23, 1
      %s29 = ssub.s32 %s23, 2
      %s30 = sadd.s32 %s23, 1
      %s31 = ssub.s32 %s23, %s30
      %p32 = scmp.eq.s32.totalorder %s31, 0
      %s34 = sadd.s32 %s33, 1
      %s35 = scalar_select %p32, %s33, %s34
      %p38 = pneg %p32
      %p39 = scmp.eq.s32.totalorder %s23, 1
      %p40 = por %p38, %p39
      %p41 = scmp.ne.s32.totalorder %s33, %s36
      %p42 = scmp.eq.s32.totalorder %s23, 0
      %p43 = por %p41, %p42
      %p44 = scmp.ne.s32.totalorder %s33, %s36
      %p45 = scmp.eq.s32.totalorder %s28, 1
      %p46 = por %p44, %p45
      %p47 = scmp.ne.s32.totalorder %s36, %s37
      %p48 = scmp.eq.s32.totalorder %s28, 0
      %p49 = por %p47, %p48
      %p50 = scmp.ne.s32.totalorder %s36, %s37
      %p51 = scmp.eq.s32.totalorder %s29, 1
      %p52 = por %p50, %p51
      %p54 = scmp.ne.s32.totalorder %s37, %s53
      %p55 = scmp.eq.s32.totalorder %s29, 0
      %p56 = por %p54, %p55
      %s58 = sadd.s32 %s57, 1
      %p61 = scmp.eq.s32.totalorder %s23, 1
      %p62 = scmp.ne.s32.totalorder %s57, %s59
      %p63 = scmp.eq.s32.totalorder %s23, 0
      %p64 = por %p62, %p63
      %p65 = scmp.ne.s32.totalorder %s57, %s59
      %p66 = scmp.eq.s32.totalorder %s28, 1
      %p67 = por %p65, %p66
      %p68 = scmp.ne.s32.totalorder %s59, %s60
      %p69 = scmp.eq.s32.totalorder %s28, 0
      %p70 = por %p68, %p69
      %p71 = scmp.ne.s32.totalorder %s59, %s60
      %p72 = scmp.eq.s32.totalorder %s29, 1
      %p73 = por %p71, %p72
      %p75 = scmp.ne.s32.totalorder %s60, %s74
      %p76 = scmp.eq.s32.totalorder %s29, 0
      %p77 = por %p75, %p76
      %s79 = sadd.s32 %s78, 1
      %p82 = scmp.eq.s32.totalorder %s23, 1
      %p83 = scmp.ne.s32.totalorder %s78, %s80
      %p84 = scmp.eq.s32.totalorder %s23, 0
      %p85 = por %p83, %p84
      %p86 = scmp.ne.s32.totalorder %s78, %s80
      %p87 = scmp.eq.s32.totalorder %s28, 1
      %p88 = por %p86, %p87
      %p89 = scmp.ne.s32.totalorder %s80, %s81
      %p90 = scmp.eq.s32.totalorder %s28, 0
      %p91 = por %p89, %p90
      %p92 = scmp.ne.s32.totalorder %s80, %s81
      %p93 = scmp.eq.s32.totalorder %s29, 1
      %p94 = por %p92, %p93
      %p96 = scmp.ne.s32.totalorder %s81, %s95
      %p97 = scmp.eq.s32.totalorder %s29, 0
      %p98 = por %p96, %p97
      %s100 = sadd.s32 %s99, 1
      %p103 = scmp.eq.s32.totalorder %s23, 1
      %p104 = scmp.ne.s32.totalorder %s99, %s101
      %p105 = scmp.eq.s32.totalorder %s23, 0
      %p106 = por %p104, %p105
      %p107 = scmp.ne.s32.totalorder %s99, %s101
      %p108 = scmp.eq.s32.totalorder %s28, 1
      %p109 = por %p107, %p108
      %p110 = scmp.ne.s32.totalorder %s101, %s102
      %p111 = scmp.eq.s32.totalorder %s28, 0
      %p112 = por %p110, %p111
      %p113 = scmp.ne.s32.totalorder %s101, %s102
      %p114 = scmp.eq.s32.totalorder %s29, 1
      %p115 = por %p113, %p114
      %p117 = scmp.ne.s32.totalorder %s102, %s116
      %p118 = scmp.eq.s32.totalorder %s29, 0
      %p119 = por %p117, %p118
      %s121 = sadd.s32 %s120, 1
      %p124 = scmp.eq.s32.totalorder %s23, 1
      %p125 = scmp.ne.s32.totalorder %s120, %s122
      %p126 = scmp.eq.s32.totalorder %s23, 0
      %p127 = por %p125, %p126
      %p128 = scmp.ne.s32.totalorder %s120, %s122
      %p129 = scmp.eq.s32.totalorder %s28, 1
      %p130 = por %p128, %p129
      %p131 = scmp.ne.s32.totalorder %s122, %s123
      %p132 = scmp.eq.s32.totalorder %s28, 0
      %p133 = por %p131, %p132
      %p134 = scmp.ne.s32.totalorder %s122, %s123
      %p135 = scmp.eq.s32.totalorder %s29, 1
      %p136 = por %p134, %p135
      %p138 = scmp.ne.s32.totalorder %s123, %s137
      %p139 = scmp.eq.s32.totalorder %s29, 0
      %p140 = por %p138, %p139
      %s142 = sadd.s32 %s141, 1
      %p145 = scmp.eq.s32.totalorder %s23, 1
      %p146 = scmp.ne.s32.totalorder %s141, %s143
      %p147 = scmp.eq.s32.totalorder %s23, 0
      %p148 = por %p146, %p147
      %p149 = scmp.ne.s32.totalorder %s141, %s143
      %p150 = scmp.eq.s32.totalorder %s28, 1
      %p151 = por %p149, %p150
      %p152 = scmp.ne.s32.totalorder %s143, %s144
      %p153 = scmp.eq.s32.totalorder %s28, 0
      %p154 = por %p152, %p153
      %p155 = scmp.ne.s32.totalorder %s143, %s144
      %p156 = scmp.eq.s32.totalorder %s29, 1
      %p157 = por %p155, %p156
      %p159 = scmp.ne.s32.totalorder %s144, %s158
      %p160 = scmp.eq.s32.totalorder %s29, 0
      %p161 = por %p159, %p160
      %s163 = sadd.s32 %s162, 1
      %p166 = scmp.eq.s32.totalorder %s23, 1
      %p167 = scmp.ne.s32.totalorder %s162, %s164
      %p168 = scmp.eq.s32.totalorder %s23, 0
      %p169 = por %p167, %p168
      %p170 = scmp.ne.s32.totalorder %s162, %s164
      %p171 = scmp.eq.s32.totalorder %s28, 1
      %p172 = por %p170, %p171
      %p173 = scmp.ne.s32.totalorder %s164, %s165
      %p174 = scmp.eq.s32.totalorder %s28, 0
      %p175 = por %p173, %p174
      %p176 = scmp.ne.s32.totalorder %s164, %s165
      %p177 = scmp.eq.s32.totalorder %s29, 1
      %p178 = por %p176, %p177
      %p180 = scmp.ne.s32.totalorder %s165, %s179
      %p181 = scmp.eq.s32.totalorder %s29, 0
      %p182 = por %p180, %p181
      %s184 = sadd.s32 %s183, 1
      %p187 = scmp.eq.s32.totalorder %s23, 1
      %p188 = scmp.ne.s32.totalorder %s183, %s185
      %p189 = scmp.eq.s32.totalorder %s23, 0
      %p190 = por %p188, %p189
      %p191 = scmp.ne.s32.totalorder %s183, %s185
      %p192 = scmp.eq.s32.totalorder %s28, 1
      %p193 = por %p191, %p192
      %p194 = scmp.ne.s32.totalorder %s185, %s186
      %p195 = scmp.eq.s32.totalorder %s28, 0
      %p196 = por %p194, %p195
      %p197 = scmp.ne.s32.totalorder %s185, %s186
      %p198 = scmp.eq.s32.totalorder %s29, 1
      %p199 = por %p197, %p198
      %p201 = scmp.ne.s32.totalorder %s186, %s200
      %p202 = scmp.eq.s32.totalorder %s29, 0
      %p203 = por %p201, %p202
      %s205 = sadd.s32 %s204, 1
      %p208 = scmp.eq.s32.totalorder %s23, 1
      %p209 = scmp.ne.s32.totalorder %s204, %s206
      %p210 = scmp.eq.s32.totalorder %s23, 0
      %p211 = por %p209, %p210
      %p212 = scmp.ne.s32.totalorder %s204, %s206
      %p213 = scmp.eq.s32.totalorder %s28, 1
      %p214 = por %p212, %p213
      %p215 = scmp.ne.s32.totalorder %s206, %s207
      %p216 = scmp.eq.s32.totalorder %s28, 0
      %p217 = por %p215, %p216
      %p218 = scmp.ne.s32.totalorder %s206, %s207
      %p219 = scmp.eq.s32.totalorder %s29, 1
      %p220 = por %p218, %p219
      %p222 = scmp.ne.s32.totalorder %s207, %s221
      %p223 = scmp.eq.s32.totalorder %s29, 0
      %p224 = por %p222, %p223
      %s226 = sadd.s32 %s225, 1
      %p229 = scmp.eq.s32.totalorder %s23, 1
      %p230 = scmp.ne.s32.totalorder %s225, %s227
      %p231 = scmp.eq.s32.totalorder %s23, 0
      %p232 = por %p230, %p231
      %p233 = scmp.ne.s32.totalorder %s225, %s227
      %p234 = scmp.eq.s32.totalorder %s28, 1
      %p235 = por %p233, %p234
      %p236 = scmp.ne.s32.totalorder %s227, %s228
      %p237 = scmp.eq.s32.totalorder %s28, 0
      %p238 = por %p236, %p237
      %p239 = scmp.ne.s32.totalorder %s227, %s228
      %p240 = scmp.eq.s32.totalorder %s29, 1
      %p241 = por %p239, %p240
      %p243 = scmp.ne.s32.totalorder %s228, %s242
      %p244 = scmp.eq.s32.totalorder %s29, 0
      %p245 = por %p243, %p244
      %s247 = sadd.s32 %s246, 1
      %p250 = scmp.eq.s32.totalorder %s23, 1
      %p251 = scmp.ne.s32.totalorder %s246, %s248
      %p252 = scmp.eq.s32.totalorder %s23, 0
      %p253 = por %p251, %p252
      %p254 = scmp.ne.s32.totalorder %s246, %s248
      %p255 = scmp.eq.s32.totalorder %s28, 1
      %p256 = por %p254, %p255
      %p257 = scmp.ne.s32.totalorder %s248, %s249
      %p258 = scmp.eq.s32.totalorder %s28, 0
      %p259 = por %p257, %p258
      %p260 = scmp.ne.s32.totalorder %s248, %s249
      %p261 = scmp.eq.s32.totalorder %s29, 1
      %p262 = por %p260, %p261
      %p264 = scmp.ne.s32.totalorder %s249, %s263
      %p265 = scmp.eq.s32.totalorder %s29, 0
      %p266 = por %p264, %p265
      %s268 = sadd.s32 %s267, 1
      %p271 = scmp.eq.s32.totalorder %s23, 1
      %p272 = scmp.ne.s32.totalorder %s267, %s269
      %p273 = scmp.eq.s32.totalorder %s23, 0
      %p274 = por %p272, %p273
      %p275 = scmp.ne.s32.totalorder %s267, %s269
      %p276 = scmp.eq.s32.totalorder %s28, 1
      %p277 = por %p275, %p276
      %p278 = scmp.ne.s32.totalorder %s269, %s270
      %p279 = scmp.eq.s32.totalorder %s28, 0
      %p280 = por %p278, %p279
      %p281 = scmp.ne.s32.totalorder %s269, %s270
      %p282 = scmp.eq.s32.totalorder %s29, 1
      %p283 = por %p281, %p282
      %p285 = scmp.ne.s32.totalorder %s270, %s284
      %p286 = scmp.eq.s32.totalorder %s29, 0
      %p287 = por %p285, %p286
      %s289 = sadd.s32 %s288, 1
      %p292 = scmp.eq.s32.totalorder %s23, 1
      %p293 = scmp.ne.s32.totalorder %s288, %s290
      %p294 = scmp.eq.s32.totalorder %s23, 0
      %p295 = por %p293, %p294
      %p296 = scmp.ne.s32.totalorder %s288, %s290
      %p297 = scmp.eq.s32.totalorder %s28, 1
      %p298 = por %p296, %p297
      %p299 = scmp.ne.s32.totalorder %s290, %s291
      %p300 = scmp.eq.s32.totalorder %s28, 0
      %p301 = por %p299, %p300
      %p302 = scmp.ne.s32.totalorder %s290, %s291
      %p303 = scmp.eq.s32.totalorder %s29, 1
      %p304 = por %p302, %p303
      %p306 = scmp.ne.s32.totalorder %s291, %s305
      %p307 = scmp.eq.s32.totalorder %s29, 0
      %p308 = por %p306, %p307
      %s310 = sadd.s32 %s309, 1
      %p313 = scmp.eq.s32.totalorder %s23, 1
      %p314 = scmp.ne.s32.totalorder %s309, %s311
      %p315 = scmp.eq.s32.totalorder %s23, 0
      %p316 = por %p314, %p315
      %p317 = scmp.ne.s32.totalorder %s309, %s311
      %p318 = scmp.eq.s32.totalorder %s28, 1
      %p319 = por %p317, %p318
      %p320 = scmp.ne.s32.totalorder %s311, %s312
      %p321 = scmp.eq.s32.totalorder %s28, 0
      %p322 = por %p320, %p321
      %p323 = scmp.ne.s32.totalorder %s311, %s312
      %p324 = scmp.eq.s32.totalorder %s29, 1
      %p325 = por %p323, %p324
      %p327 = scmp.ne.s32.totalorder %s312, %s326
      %p328 = scmp.eq.s32.totalorder %s29, 0
      %p329 = por %p327, %p328
      %s330 = ssub.s32 %s23, %s30
      %p331 = scmp.eq.s32.totalorder %s330, 0
      %s333 = sadd.s32 %s332, 1
      %s334 = scalar_select %p331, %s332, %s333
      %p337 = pneg %p331
      %p338 = scmp.eq.s32.totalorder %s23, 1
      %p339 = por %p337, %p338
      %p340 = scmp.ne.s32.totalorder %s332, %s335
      %p341 = scmp.eq.s32.totalorder %s23, 0
      %p342 = por %p340, %p341
      %p343 = scmp.ne.s32.totalorder %s332, %s335
      %p344 = scmp.eq.s32.totalorder %s28, 1
      %p345 = por %p343, %p344
      %p346 = scmp.ne.s32.totalorder %s335, %s336
      %p347 = scmp.eq.s32.totalorder %s28, 0
      %p348 = por %p346, %p347
      %p349 = scmp.ne.s32.totalorder %s335, %s336
      %p350 = scmp.eq.s32.totalorder %s29, 1
      %p351 = por %p349, %p350
      %p353 = scmp.ne.s32.totalorder %s336, %s352
      %p354 = scmp.eq.s32.totalorder %s29, 0
      %p355 = por %p353, %p354
      %p356 = scmp.le.s32.totalorder 1, %s23
      %p357 = scmp.lt.s32.totalorder %s23, 3
      %p358 = pnand %p356, %p357
      %p359 = pneg %p358
      // Predicated region
      $region9: #{tpu_custom_call.1} parent=5 // pred_check
        _
      $region10: #{tpu_custom_call.1} parent=5 // pred_check_branch
        %361 = sbr.rel (%p358) target = $region12
      $region11: #{tpu_custom_call.1} parent=5 // pred_region
        %s362 = ssub.s32 %s23, 1
        // Predicated region
        $region13: #{tpu_custom_call.1} parent=11 // pred_check
          %p363 = pneg %p70
        $region14: #{tpu_custom_call.1} parent=11 // pred_check_branch
          %365 = sbr.rel (%p363) target = $region16
        $region15: #{tpu_custom_call.1} parent=11 // pred_region
          _
        $region16: #{tpu_custom_call.1} parent=11 // pred_fallthru
          _
        // Predicated region
        $region17: #{tpu_custom_call.1} parent=11 // pred_check
          %p366 = pneg %p91
        $region18: #{tpu_custom_call.1} parent=11 // pred_check_branch
          %368 = sbr.rel (%p366) target = $region20
        $region19: #{tpu_custom_call.1} parent=11 // pred_region
          _
        $region20: #{tpu_custom_call.1} parent=11 // pred_fallthru
          _
        // Predicated region
        $region21: #{tpu_custom_call.1} parent=11 // pred_check
          %p369 = pneg %p112
        $region22: #{tpu_custom_call.1} parent=11 // pred_check_branch
          %371 = sbr.rel (%p369) target = $region24
        $region23: #{tpu_custom_call.1} parent=11 // pred_region
          _
        $region24: #{tpu_custom_call.1} parent=11 // pred_fallthru
          _
        // Predicated region
        $region25: #{tpu_custom_call.1} parent=11 // pred_check
          %p372 = pneg %p133
        $region26: #{tpu_custom_call.1} parent=11 // pred_check_branch
          %374 = sbr.rel (%p372) target = $region28
        $region27: #{tpu_custom_call.1} parent=11 // pred_region
          _
        $region28: #{tpu_custom_call.1} parent=11 // pred_fallthru
          _
        // Predicated region
        $region29: #{tpu_custom_call.1} parent=11 // pred_check
          %p375 = pneg %p154
        $region30: #{tpu_custom_call.1} parent=11 // pred_check_branch
          %377 = sbr.rel (%p375) target = $region32
        $region31: #{tpu_custom_call.1} parent=11 // pred_region
          _
        $region32: #{tpu_custom_call.1} parent=11 // pred_fallthru
          _
        // Predicated region
        $region33: #{tpu_custom_call.1} parent=11 // pred_check
          %p378 = pneg %p175
        $region34: #{tpu_custom_call.1} parent=11 // pred_check_branch
          %380 = sbr.rel (%p378) target = $region36
        $region35: #{tpu_custom_call.1} parent=11 // pred_region
          _
        $region36: #{tpu_custom_call.1} parent=11 // pred_fallthru
          _
        // Predicated region
        $region37: #{tpu_custom_call.1} parent=11 // pred_check
          %p381 = pneg %p196
        $region38: #{tpu_custom_call.1} parent=11 // pred_check_branch
          %383 = sbr.rel (%p381) target = $region40
        $region39: #{tpu_custom_call.1} parent=11 // pred_region
          _
        $region40: #{tpu_custom_call.1} parent=11 // pred_fallthru
          _
        // Predicated region
        $region41: #{tpu_custom_call.1} parent=11 // pred_check
          %p384 = pneg %p217
        $region42: #{tpu_custom_call.1} parent=11 // pred_check_branch
          %386 = sbr.rel (%p384) target = $region44
        $region43: #{tpu_custom_call.1} parent=11 // pred_region
          _
        $region44: #{tpu_custom_call.1} parent=11 // pred_fallthru
          _
        // Predicated region
        $region45: #{tpu_custom_call.1} parent=11 // pred_check
          %p387 = pneg %p238
        $region46: #{tpu_custom_call.1} parent=11 // pred_check_branch
          %389 = sbr.rel (%p387) target = $region48
        $region47: #{tpu_custom_call.1} parent=11 // pred_region
          _
        $region48: #{tpu_custom_call.1} parent=11 // pred_fallthru
          _
        // Predicated region
        $region49: #{tpu_custom_call.1} parent=11 // pred_check
          %p390 = pneg %p259
        $region50: #{tpu_custom_call.1} parent=11 // pred_check_branch
          %392 = sbr.rel (%p390) target = $region52
        $region51: #{tpu_custom_call.1} parent=11 // pred_region
          _
        $region52: #{tpu_custom_call.1} parent=11 // pred_fallthru
          _
        // Predicated region
        $region53: #{tpu_custom_call.1} parent=11 // pred_check
          %p393 = pneg %p280
        $region54: #{tpu_custom_call.1} parent=11 // pred_check_branch
          %395 = sbr.rel (%p393) target = $region56
        $region55: #{tpu_custom_call.1} parent=11 // pred_region
          _
        $region56: #{tpu_custom_call.1} parent=11 // pred_fallthru
          _
        // Predicated region
        $region57: #{tpu_custom_call.1} parent=11 // pred_check
          %p396 = pneg %p301
        $region58: #{tpu_custom_call.1} parent=11 // pred_check_branch
          %398 = sbr.rel (%p396) target = $region60
        $region59: #{tpu_custom_call.1} parent=11 // pred_region
          _
        $region60: #{tpu_custom_call.1} parent=11 // pred_fallthru
          _
        // Predicated region
        $region61: #{tpu_custom_call.1} parent=11 // pred_check
          %p399 = pneg %p322
        $region62: #{tpu_custom_call.1} parent=11 // pred_check_branch
          %401 = sbr.rel (%p399) target = $region64
        $region63: #{tpu_custom_call.1} parent=11 // pred_region
          _
        $region64: #{tpu_custom_call.1} parent=11 // pred_fallthru
          _
      $region12: #{tpu_custom_call.1} parent=5 // pred_fallthru
        _
      %p402 = scmp.lt.s32.totalorder %s23, 2
      // Predicated region
      $region65: #{tpu_custom_call.1} parent=5 // pred_check
        %p403 = pneg %p402
      $region66: #{tpu_custom_call.1} parent=5 // pred_check_branch
        %405 = sbr.rel (%p403) target = $region68
      $region67: #{tpu_custom_call.1} parent=5 // pred_region
        // Predicated region
        $region69: #{tpu_custom_call.1} parent=67 // pred_check
          %p406 = pneg %p43
        $region70: #{tpu_custom_call.1} parent=67 // pred_check_branch
          %408 = sbr.rel (%p406) target = $region72
        $region71: #{tpu_custom_call.1} parent=67 // pred_region
          %p409 = scmp.lt.s32.totalorder %s23, 1
          %s410 = scalar_select %p409, %s23, 1
          %s411 = smul.addr %s410, 4
          %s412 = smul.addr %s411, 8
          %s413 = scalar_lea.vmem %s0, %s412
        $region72: #{tpu_custom_call.1} parent=67 // pred_fallthru
          _
      $region68: #{tpu_custom_call.1} parent=5 // pred_fallthru
        _
      %p414 = scmp.le.s32.totalorder 1, %s23
      %p415 = scmp.lt.s32.totalorder %s23, 3
      %p416 = pnand %p414, %p415
      %p417 = pneg %p416
      // Predicated region
      $region73: #{tpu_custom_call.1} parent=5 // pred_check
        _
      $region74: #{tpu_custom_call.1} parent=5 // pred_check_branch
        %419 = sbr.rel (%p416) target = $region76
      $region75: #{tpu_custom_call.1} parent=5 // pred_region
        %s420 = ssub.s32 %s23, 1
        %p421 = scmp.lt.s32.totalorder %s28, 1
        %s422 = scalar_select %p421, %s28, 1
        %s423 = smul.addr %s422, 4
        %s424 = smul.addr %s423, 8
        %s425 = scalar_lea.vmem %s0, %s424
        %p426 = pneg %p49
        %p427 = pneg %p46
        %p428 = pneg %p70
        %p429 = pneg %p67
        %p430 = pneg %p91
        %p431 = pneg %p88
        %p432 = pneg %p112
        %p433 = pneg %p109
        %p434 = pneg %p133
        %p435 = pneg %p130
        %p436 = pneg %p154
        %p437 = pneg %p151
        %p438 = pneg %p175
        %p439 = pneg %p172
        %p440 = pneg %p196
        %p441 = pneg %p193
        %p442 = pneg %p217
        %p443 = pneg %p214
        %p444 = pneg %p238
        %p445 = pneg %p235
        %p446 = pneg %p259
        %p447 = pneg %p256
        %p448 = pneg %p280
        %p449 = pneg %p277
        %p450 = pneg %p301
        %p451 = pneg %p298
        %p452 = pneg %p322
        %p453 = pneg %p319
        %p454 = pneg %p348
        %p455 = pneg %p345
        %s456 = sand.u32 %s335, 1
        %s457 = scalar_lea.sflag [#allocation3], %s456
        %s458 = sand.u32 %s335, 1
        %s459 = smul.addr %s458, 32
        %s460 = scalar_lea.vmem [#allocation2], %s459
        %p461 = scmp.lt.s32.totalorder %s28, 1
        %s462 = scalar_select %p461, %s28, 1
        %s463 = smul.addr %s462, 4
        %s464 = smul.addr %s463, 8
        %s465 = scalar_lea.vmem %s0, %s464
        %v466 = vld [vmem:[%s465] sm:$0xff]
        %v467 = vld [vmem:[%s465 + $0x8] sm:$0xff]
        %v468 = vld [vmem:[%s465 + $0x10] sm:$0xff]
        %v469 = vld [vmem:[%s465 + $0x18] sm:$0xff]
        %v470 = vld [vmem:[%s1] sm:$0xff]
        %v471 = vld [vmem:[%s1 + $0x8] sm:$0xff]
        %v472 = vld [vmem:[%s1 + $0x10] sm:$0xff]
        %v473 = vld [vmem:[%s1 + $0x18] sm:$0xff]
        %v474 = vld [vmem:[%s1 + $0x20] sm:$0xff]
        %v475 = vld [vmem:[%s1 + $0x28] sm:$0xff]
        %v476 = vld [vmem:[%s1 + $0x30] sm:$0xff]
        %v477 = vld [vmem:[%s1 + $0x38] sm:$0xff]
        %v478 = vld [vmem:[%s2] sm:$0xff]
        %v479 = vld [vmem:[%s2 + $0x8] sm:$0xff]
        %v480 = vld [vmem:[%s2 + $0x10] sm:$0xff]
        %v481 = vld [vmem:[%s2 + $0x18] sm:$0xff]
        %v482 = vld [vmem:[%s2 + $0x20] sm:$0xff]
        %v483 = vld [vmem:[%s2 + $0x28] sm:$0xff]
        %v484 = vld [vmem:[%s2 + $0x30] sm:$0xff]
        %v485 = vld [vmem:[%s2 + $0x38] sm:$0xff]
        %487 = vset.pattern.permute.xlu0 0
        %488 = vperm.xlu0 %487, %v478
        %v489 = vpop.permute.xlu0 %488
        %492 = vset.pattern.permute.xlu0 0
        %493 = vperm.xlu0 %492, %v479
        %v494 = vpop.permute.xlu0 %493
        %497 = vset.pattern.permute.xlu0 0
        %498 = vperm.xlu0 %497, %v480
        %v499 = vpop.permute.xlu0 %498
        %502 = vset.pattern.permute.xlu0 0
        %503 = vperm.xlu0 %502, %v481
        %v504 = vpop.permute.xlu0 %503
        %507 = vset.pattern.permute.xlu0 0
        %508 = vperm.xlu0 %507, %v482
        %v509 = vpop.permute.xlu0 %508
        %512 = vset.pattern.permute.xlu0 0
        %513 = vperm.xlu0 %512, %v483
        %v514 = vpop.permute.xlu0 %513
        %517 = vset.pattern.permute.xlu0 0
        %518 = vperm.xlu0 %517, %v484
        %v519 = vpop.permute.xlu0 %518
        %522 = vset.pattern.permute.xlu0 0
        %523 = vperm.xlu0 %522, %v485
        %v524 = vpop.permute.xlu0 %523
        %vm526 = vcmask 130048
        %v528 = vsel %vm526, %v470, 0
        %v531 = vsel %vm526, %v471, 0
        %v534 = vsel %vm526, %v472, 0
        %v537 = vsel %vm526, %v473, 0
        %v540 = vsel %vm526, %v474, 0
        %v543 = vsel %vm526, %v475, 0
        %v546 = vsel %vm526, %v476, 0
        %v549 = vsel %vm526, %v477, 0
        %551 = vmatpush.msra.mxu0 0.0
        %552 = vmatpush.msra.mxu0 0.0
        %553 = vmatpush.msra.mxu0 0.0
        %554 = vmatpush.msra.mxu0 0.0
        %555 = vmatpush.msra.mxu0 0.0
        %556 = vmatpush.msra.mxu0 0.0
        %557 = vmatpush.msra.mxu0 0.0
        %558 = vmatpush.msra.mxu0 0.0
        %559 = vmatpush.msra.mxu0 0.0
        %560 = vmatpush.msra.mxu0 0.0
        %561 = vmatpush.msra.mxu0 0.0
        %562 = vmatpush.msra.mxu0 0.0
        %563 = vmatpush.msra.mxu0 0.0
        %564 = vmatpush.msra.mxu0 0.0
        %565 = vmatpush.msra.mxu0 %v468
        %566 = vmatpush.msra.mxu0 %v466
        %567 = vmatmul.f32.gmra.mxu0 %v528
        %v568 = vpop.f32.mrf.mxu0
        %v569 = vadd.f32 %v489, %v568
        %570 = vmatmul.f32.gmra.mxu0 %v531
        %v571 = vpop.f32.mrf.mxu0
        %v572 = vadd.f32 %v494, %v571
        %573 = vmatmul.f32.gmra.mxu0 %v534
        %v574 = vpop.f32.mrf.mxu0
        %v575 = vadd.f32 %v499, %v574
        %576 = vmatmul.f32.gmra.mxu0 %v537
        %v577 = vpop.f32.mrf.mxu0
        %v578 = vadd.f32 %v504, %v577
        %579 = vmatmul.f32.gmra.mxu0 %v540
        %v580 = vpop.f32.mrf.mxu0
        %v581 = vadd.f32 %v509, %v580
        %582 = vmatmul.f32.gmra.mxu0 %v543
        %v583 = vpop.f32.mrf.mxu0
        %v584 = vadd.f32 %v514, %v583
        %585 = vmatmul.f32.gmra.mxu0 %v546
        %v586 = vpop.f32.mrf.mxu0
        %v587 = vadd.f32 %v519, %v586
        %588 = vmatmul.f32.gmra.mxu0 %v549
        %v589 = vpop.f32.mrf.mxu0
        %v590 = vadd.f32 %v524, %v589
        %591 = vdwg.mxu0
        %592 = vmatpush.msra.mxu0 0.0
        %593 = vmatpush.msra.mxu0 0.0
        %594 = vmatpush.msra.mxu0 0.0
        %595 = vmatpush.msra.mxu0 0.0
        %596 = vmatpush.msra.mxu0 0.0
        %597 = vmatpush.msra.mxu0 0.0
        %598 = vmatpush.msra.mxu0 0.0
        %599 = vmatpush.msra.mxu0 0.0
        %600 = vmatpush.msra.mxu0 0.0
        %601 = vmatpush.msra.mxu0 0.0
        %602 = vmatpush.msra.mxu0 0.0
        %603 = vmatpush.msra.mxu0 0.0
        %604 = vmatpush.msra.mxu0 0.0
        %605 = vmatpush.msra.mxu0 0.0
        %606 = vmatpush.msra.mxu0 %v469
        %607 = vmatpush.msra.mxu0 %v467
        %608 = vmatmul.f32.gmra.mxu0 %v528
        %v609 = vpop.f32.mrf.mxu0
        %v610 = vadd.f32 %v489, %v609
        %611 = vmatmul.f32.gmra.mxu0 %v531
        %v612 = vpop.f32.mrf.mxu0
        %v613 = vadd.f32 %v494, %v612
        %614 = vmatmul.f32.gmra.mxu0 %v534
        %v615 = vpop.f32.mrf.mxu0
        %v616 = vadd.f32 %v499, %v615
        %617 = vmatmul.f32.gmra.mxu0 %v537
        %v618 = vpop.f32.mrf.mxu0
        %v619 = vadd.f32 %v504, %v618
        %620 = vmatmul.f32.gmra.mxu0 %v540
        %v621 = vpop.f32.mrf.mxu0
        %v622 = vadd.f32 %v509, %v621
        %623 = vmatmul.f32.gmra.mxu0 %v543
        %v624 = vpop.f32.mrf.mxu0
        %v625 = vadd.f32 %v514, %v624
        %626 = vmatmul.f32.gmra.mxu0 %v546
        %v627 = vpop.f32.mrf.mxu0
        %v628 = vadd.f32 %v519, %v627
        %629 = vmatmul.f32.gmra.mxu0 %v549
        %v630 = vpop.f32.mrf.mxu0
        %v631 = vadd.f32 %v524, %v630
        %632 = vdwg.mxu0
        %v633 = vadd.f32 %v569, 3.0
        %v634 = vadd.f32 %v610, 3.0
        %v635 = vadd.f32 %v572, 3.0
        %v636 = vadd.f32 %v613, 3.0
        %v637 = vadd.f32 %v575, 3.0
        %v638 = vadd.f32 %v616, 3.0
        %v639 = vadd.f32 %v578, 3.0
        %v640 = vadd.f32 %v619, 3.0
        %v641 = vadd.f32 %v581, 3.0
        %v642 = vadd.f32 %v622, 3.0
        %v643 = vadd.f32 %v584, 3.0
        %v644 = vadd.f32 %v625, 3.0
        %v645 = vadd.f32 %v587, 3.0
        %v646 = vadd.f32 %v628, 3.0
        %v647 = vadd.f32 %v590, 3.0
        %v648 = vadd.f32 %v631, 3.0
        %v649 = vmax.f32 %v633, 0.0
        %v650 = vmax.f32 %v634, 0.0
        %v651 = vmax.f32 %v635, 0.0
        %v652 = vmax.f32 %v636, 0.0
        %v653 = vmax.f32 %v637, 0.0
        %v654 = vmax.f32 %v638, 0.0
        %v655 = vmax.f32 %v639, 0.0
        %v656 = vmax.f32 %v640, 0.0
        %v657 = vmax.f32 %v641, 0.0
        %v658 = vmax.f32 %v642, 0.0
        %v659 = vmax.f32 %v643, 0.0
        %v660 = vmax.f32 %v644, 0.0
        %v661 = vmax.f32 %v645, 0.0
        %v662 = vmax.f32 %v646, 0.0
        %v663 = vmax.f32 %v647, 0.0
        %v664 = vmax.f32 %v648, 0.0
        %v665 = vmin.f32 %v649, 6.0
        %v666 = vmin.f32 %v650, 6.0
        %v667 = vmin.f32 %v651, 6.0
        %v668 = vmin.f32 %v652, 6.0
        %v669 = vmin.f32 %v653, 6.0
        %v670 = vmin.f32 %v654, 6.0
        %v671 = vmin.f32 %v655, 6.0
        %v672 = vmin.f32 %v656, 6.0
        %v673 = vmin.f32 %v657, 6.0
        %v674 = vmin.f32 %v658, 6.0
        %v675 = vmin.f32 %v659, 6.0
        %v676 = vmin.f32 %v660, 6.0
        %v677 = vmin.f32 %v661, 6.0
        %v678 = vmin.f32 %v662, 6.0
        %v679 = vmin.f32 %v663, 6.0
        %v680 = vmin.f32 %v664, 6.0
        %v681 = vmul.f32 %v665, 0.16666667
        %v682 = vmul.f32 %v666, 0.16666667
        %v683 = vmul.f32 %v667, 0.16666667
        %v684 = vmul.f32 %v668, 0.16666667
        %v685 = vmul.f32 %v669, 0.16666667
        %v686 = vmul.f32 %v670, 0.16666667
        %v687 = vmul.f32 %v671, 0.16666667
        %v688 = vmul.f32 %v672, 0.16666667
        %v689 = vmul.f32 %v673, 0.16666667
        %v690 = vmul.f32 %v674, 0.16666667
        %v691 = vmul.f32 %v675, 0.16666667
        %v692 = vmul.f32 %v676, 0.16666667
        %v693 = vmul.f32 %v677, 0.16666667
        %v694 = vmul.f32 %v678, 0.16666667
        %v695 = vmul.f32 %v679, 0.16666667
        %v696 = vmul.f32 %v680, 0.16666667
        %v697 = vmul.f32 %v569, %v681
        %v698 = vmul.f32 %v610, %v682
        %v699 = vmul.f32 %v572, %v683
        %v700 = vmul.f32 %v613, %v684
        %v701 = vmul.f32 %v575, %v685
        %v702 = vmul.f32 %v616, %v686
        %v703 = vmul.f32 %v578, %v687
        %v704 = vmul.f32 %v619, %v688
        %v705 = vmul.f32 %v581, %v689
        %v706 = vmul.f32 %v622, %v690
        %v707 = vmul.f32 %v584, %v691
        %v708 = vmul.f32 %v625, %v692
        %v709 = vmul.f32 %v587, %v693
        %v710 = vmul.f32 %v628, %v694
        %v711 = vmul.f32 %v590, %v695
        %v712 = vmul.f32 %v631, %v696
        %713 = vrot.lane.b32.xlu0 %v697, 17
        %v714 = vpop.permute.xlu0 %713
        %715 = vrot.lane.b32.xlu0 %v699, 17
        %v716 = vpop.permute.xlu0 %715
        %717 = vrot.lane.b32.xlu0 %v701, 17
        %v718 = vpop.permute.xlu0 %717
        %719 = vrot.lane.b32.xlu0 %v703, 17
        %v720 = vpop.permute.xlu0 %719
        %721 = vrot.lane.b32.xlu0 %v705, 17
        %v722 = vpop.permute.xlu0 %721
        %723 = vrot.lane.b32.xlu0 %v707, 17
        %v724 = vpop.permute.xlu0 %723
        %725 = vrot.lane.b32.xlu0 %v709, 17
        %v726 = vpop.permute.xlu0 %725
        %727 = vrot.lane.b32.xlu0 %v711, 17
        %v728 = vpop.permute.xlu0 %727
        %729 = vrot.lane.b32.xlu0 %v698, 17
        %v730 = vpop.permute.xlu0 %729
        %731 = vrot.lane.b32.xlu0 %v700, 17
        %v732 = vpop.permute.xlu0 %731
        %733 = vrot.lane.b32.xlu0 %v702, 17
        %v734 = vpop.permute.xlu0 %733
        %735 = vrot.lane.b32.xlu0 %v704, 17
        %v736 = vpop.permute.xlu0 %735
        %737 = vrot.lane.b32.xlu0 %v706, 17
        %v738 = vpop.permute.xlu0 %737
        %739 = vrot.lane.b32.xlu0 %v708, 17
        %v740 = vpop.permute.xlu0 %739
        %741 = vrot.lane.b32.xlu0 %v710, 17
        %v742 = vpop.permute.xlu0 %741
        %743 = vrot.lane.b32.xlu0 %v712, 17
        %v744 = vpop.permute.xlu0 %743
        %v745 = vlaneseq
        %v746 = vand.u32 %v745, 127
        %vm747 = vcmp.lt.s32.totalorder %v746, 17
        %v748 = vsel %vm747, %v714, %v730
        %v749 = vsel %vm747, %v716, %v732
        %v750 = vsel %vm747, %v718, %v734
        %v751 = vsel %vm747, %v720, %v736
        %v752 = vsel %vm747, %v722, %v738
        %v753 = vsel %vm747, %v724, %v740
        %v754 = vsel %vm747, %v726, %v742
        %v755 = vsel %vm747, %v728, %v744
        %v756 = vsel %vm747, %v730, %v714
        %v757 = vsel %vm747, %v732, %v716
        %v758 = vsel %vm747, %v734, %v718
        %v759 = vsel %vm747, %v736, %v720
        %v760 = vsel %vm747, %v738, %v722
        %v761 = vsel %vm747, %v740, %v724
        %v762 = vsel %vm747, %v742, %v726
        %v763 = vsel %vm747, %v744, %v728
        %v764 = vld [vmem:[%s3] sm:$0xff]
        %v765 = vld [vmem:[%s3 + $0x8] sm:$0xff]
        %v766 = vld [vmem:[%s3 + $0x10] sm:$0xff]
        %v767 = vld [vmem:[%s3 + $0x18] sm:$0xff]
        %v768 = vld [vmem:[%s3 + $0x20] sm:$0xff]
        %v769 = vld [vmem:[%s3 + $0x28] sm:$0xff]
        %v770 = vld [vmem:[%s3 + $0x30] sm:$0xff]
        %v771 = vld [vmem:[%s3 + $0x38] sm:$0xff]
        %v772 = vld [vmem:[%s5] ss:$8 sm:$0x3]
        %774 = vset.pattern.permute.xlu0 0
        %775 = vperm.xlu0 %774, %v764
        %v776 = vpop.permute.xlu0 %775
        %779 = vset.pattern.permute.xlu0 0
        %780 = vperm.xlu0 %779, %v765
        %v781 = vpop.permute.xlu0 %780
        %784 = vset.pattern.permute.xlu0 0
        %785 = vperm.xlu0 %784, %v766
        %v786 = vpop.permute.xlu0 %785
        %789 = vset.pattern.permute.xlu0 0
        %790 = vperm.xlu0 %789, %v767
        %v791 = vpop.permute.xlu0 %790
        %794 = vset.pattern.permute.xlu0 0
        %795 = vperm.xlu0 %794, %v768
        %v796 = vpop.permute.xlu0 %795
        %799 = vset.pattern.permute.xlu0 0
        %800 = vperm.xlu0 %799, %v769
        %v801 = vpop.permute.xlu0 %800
        %804 = vset.pattern.permute.xlu0 0
        %805 = vperm.xlu0 %804, %v770
        %v806 = vpop.permute.xlu0 %805
        %809 = vset.pattern.permute.xlu0 0
        %810 = vperm.xlu0 %809, %v771
        %v811 = vpop.permute.xlu0 %810
        %v814 = vperm.slane %v772, 0
        %v815 = vperm.slane %v772, 1
        %v818 = vmul.f32 %v776, %v814
        %v819 = vmul.f32 %v776, %v815
        %v820 = vmul.f32 %v781, %v814
        %v821 = vmul.f32 %v781, %v815
        %v822 = vmul.f32 %v786, %v814
        %v823 = vmul.f32 %v786, %v815
        %v824 = vmul.f32 %v791, %v814
        %v825 = vmul.f32 %v791, %v815
        %v826 = vmul.f32 %v796, %v814
        %v827 = vmul.f32 %v796, %v815
        %v828 = vmul.f32 %v801, %v814
        %v829 = vmul.f32 %v801, %v815
        %v830 = vmul.f32 %v806, %v814
        %v831 = vmul.f32 %v806, %v815
        %v832 = vmul.f32 %v811, %v814
        %v833 = vmul.f32 %v811, %v815
        %v834 = vmul.f32 %v756, %v818
        %v835 = vmul.f32 %v748, %v819
        %v836 = vmul.f32 %v757, %v820
        %v837 = vmul.f32 %v749, %v821
        %v838 = vmul.f32 %v758, %v822
        %v839 = vmul.f32 %v750, %v823
        %v840 = vmul.f32 %v759, %v824
        %v841 = vmul.f32 %v751, %v825
        %v842 = vmul.f32 %v760, %v826
        %v843 = vmul.f32 %v752, %v827
        %v844 = vmul.f32 %v761, %v828
        %v845 = vmul.f32 %v753, %v829
        %v846 = vmul.f32 %v762, %v830
        %v847 = vmul.f32 %v754, %v831
        %v848 = vmul.f32 %v763, %v832
        %v849 = vmul.f32 %v755, %v833
        %v850 = vadd.f32 %v834, 0.0
        %v851 = vadd.f32 %v835, 0.0
        %v852 = vadd.f32 %v836, 0.0
        %v853 = vadd.f32 %v837, 0.0
        %v854 = vadd.f32 %v838, 0.0
        %v855 = vadd.f32 %v839, 0.0
        %v856 = vadd.f32 %v840, 0.0
        %v857 = vadd.f32 %v841, 0.0
        %v858 = vadd.f32 %v842, 0.0
        %v859 = vadd.f32 %v843, 0.0
        %v860 = vadd.f32 %v844, 0.0
        %v861 = vadd.f32 %v845, 0.0
        %v862 = vadd.f32 %v846, 0.0
        %v863 = vadd.f32 %v847, 0.0
        %v864 = vadd.f32 %v848, 0.0
        %v865 = vadd.f32 %v849, 0.0
        %866 = vrot.lane.b32.xlu0 %v697, 16
        %v867 = vpop.permute.xlu0 %866
        %868 = vrot.lane.b32.xlu0 %v699, 16
        %v869 = vpop.permute.xlu0 %868
        %870 = vrot.lane.b32.xlu0 %v701, 16
        %v871 = vpop.permute.xlu0 %870
        %872 = vrot.lane.b32.xlu0 %v703, 16
        %v873 = vpop.permute.xlu0 %872
        %874 = vrot.lane.b32.xlu0 %v705, 16
        %v875 = vpop.permute.xlu0 %874
        %876 = vrot.lane.b32.xlu0 %v707, 16
        %v877 = vpop.permute.xlu0 %876
        %878 = vrot.lane.b32.xlu0 %v709, 16
        %v879 = vpop.permute.xlu0 %878
        %880 = vrot.lane.b32.xlu0 %v711, 16
        %v881 = vpop.permute.xlu0 %880
        %882 = vrot.lane.b32.xlu0 %v698, 16
        %v883 = vpop.permute.xlu0 %882
        %884 = vrot.lane.b32.xlu0 %v700, 16
        %v885 = vpop.permute.xlu0 %884
        %886 = vrot.lane.b32.xlu0 %v702, 16
        %v887 = vpop.permute.xlu0 %886
        %888 = vrot.lane.b32.xlu0 %v704, 16
        %v889 = vpop.permute.xlu0 %888
        %890 = vrot.lane.b32.xlu0 %v706, 16
        %v891 = vpop.permute.xlu0 %890
        %892 = vrot.lane.b32.xlu0 %v708, 16
        %v893 = vpop.permute.xlu0 %892
        %894 = vrot.lane.b32.xlu0 %v710, 16
        %v895 = vpop.permute.xlu0 %894
        %896 = vrot.lane.b32.xlu0 %v712, 16
        %v897 = vpop.permute.xlu0 %896
        %vm898 = vcmp.lt.s32.totalorder %v746, 16
        %v899 = vsel %vm898, %v867, %v883
        %v900 = vsel %vm898, %v869, %v885
        %v901 = vsel %vm898, %v871, %v887
        %v902 = vsel %vm898, %v873, %v889
        %v903 = vsel %vm898, %v875, %v891
        %v904 = vsel %vm898, %v877, %v893
        %v905 = vsel %vm898, %v879, %v895
        %v906 = vsel %vm898, %v881, %v897
        %v907 = vsel %vm898, %v883, %v867
        %v908 = vsel %vm898, %v885, %v869
        %v909 = vsel %vm898, %v887, %v871
        %v910 = vsel %vm898, %v889, %v873
        %v911 = vsel %vm898, %v891, %v875
        %v912 = vsel %vm898, %v893, %v877
        %v913 = vsel %vm898, %v895, %v879
        %v914 = vsel %vm898, %v897, %v881
        %s915 = scalar_lea.vmem %s5, 1
        %v916 = vld [vmem:[%s915] ss:$8 sm:$0x3]
        %917 = vset.pattern.permute.xlu0 1
        %918 = vperm.xlu0 %917, %v764
        %v919 = vpop.permute.xlu0 %918
        %921 = vset.pattern.permute.xlu0 1
        %922 = vperm.xlu0 %921, %v765
        %v923 = vpop.permute.xlu0 %922
        %925 = vset.pattern.permute.xlu0 1
        %926 = vperm.xlu0 %925, %v766
        %v927 = vpop.permute.xlu0 %926
        %929 = vset.pattern.permute.xlu0 1
        %930 = vperm.xlu0 %929, %v767
        %v931 = vpop.permute.xlu0 %930
        %933 = vset.pattern.permute.xlu0 1
        %934 = vperm.xlu0 %933, %v768
        %v935 = vpop.permute.xlu0 %934
        %937 = vset.pattern.permute.xlu0 1
        %938 = vperm.xlu0 %937, %v769
        %v939 = vpop.permute.xlu0 %938
        %941 = vset.pattern.permute.xlu0 1
        %942 = vperm.xlu0 %941, %v770
        %v943 = vpop.permute.xlu0 %942
        %945 = vset.pattern.permute.xlu0 1
        %946 = vperm.xlu0 %945, %v771
        %v947 = vpop.permute.xlu0 %946
        %v950 = vperm.slane %v916, 0
        %v951 = vperm.slane %v916, 1
        %v954 = vmul.f32 %v919, %v950
        %v955 = vmul.f32 %v919, %v951
        %v956 = vmul.f32 %v923, %v950
        %v957 = vmul.f32 %v923, %v951
        %v958 = vmul.f32 %v927, %v950
        %v959 = vmul.f32 %v927, %v951
        %v960 = vmul.f32 %v931, %v950
        %v961 = vmul.f32 %v931, %v951
        %v962 = vmul.f32 %v935, %v950
        %v963 = vmul.f32 %v935, %v951
        %v964 = vmul.f32 %v939, %v950
        %v965 = vmul.f32 %v939, %v951
        %v966 = vmul.f32 %v943, %v950
        %v967 = vmul.f32 %v943, %v951
        %v968 = vmul.f32 %v947, %v950
        %v969 = vmul.f32 %v947, %v951
        %v970 = vmul.f32 %v907, %v954
        %v971 = vmul.f32 %v899, %v955
        %v972 = vmul.f32 %v908, %v956
        %v973 = vmul.f32 %v900, %v957
        %v974 = vmul.f32 %v909, %v958
        %v975 = vmul.f32 %v901, %v959
        %v976 = vmul.f32 %v910, %v960
        %v977 = vmul.f32 %v902, %v961
        %v978 = vmul.f32 %v911, %v962
        %v979 = vmul.f32 %v903, %v963
        %v980 = vmul.f32 %v912, %v964
        %v981 = vmul.f32 %v904, %v965
        %v982 = vmul.f32 %v913, %v966
        %v983 = vmul.f32 %v905, %v967
        %v984 = vmul.f32 %v914, %v968
        %v985 = vmul.f32 %v906, %v969
        %v986 = vadd.f32 %v850, %v970
        %v987 = vadd.f32 %v851, %v971
        %v988 = vadd.f32 %v852, %v972
        %v989 = vadd.f32 %v853, %v973
        %v990 = vadd.f32 %v854, %v974
        %v991 = vadd.f32 %v855, %v975
        %v992 = vadd.f32 %v856, %v976
        %v993 = vadd.f32 %v857, %v977
        %v994 = vadd.f32 %v858, %v978
        %v995 = vadd.f32 %v859, %v979
        %v996 = vadd.f32 %v860, %v980
        %v997 = vadd.f32 %v861, %v981
        %v998 = vadd.f32 %v862, %v982
        %v999 = vadd.f32 %v863, %v983
        %v1000 = vadd.f32 %v864, %v984
        %v1001 = vadd.f32 %v865, %v985
        %1002 = vrot.lane.b32.xlu0 %v697, 15
        %v1003 = vpop.permute.xlu0 %1002
        %1004 = vrot.lane.b32.xlu0 %v699, 15
        %v1005 = vpop.permute.xlu0 %1004
        %1006 = vrot.lane.b32.xlu0 %v701, 15
        %v1007 = vpop.permute.xlu0 %1006
        %1008 = vrot.lane.b32.xlu0 %v703, 15
        %v1009 = vpop.permute.xlu0 %1008
        %1010 = vrot.lane.b32.xlu0 %v705, 15
        %v1011 = vpop.permute.xlu0 %1010
        %1012 = vrot.lane.b32.xlu0 %v707, 15
        %v1013 = vpop.permute.xlu0 %1012
        %1014 = vrot.lane.b32.xlu0 %v709, 15
        %v1015 = vpop.permute.xlu0 %1014
        %1016 = vrot.lane.b32.xlu0 %v711, 15
        %v1017 = vpop.permute.xlu0 %1016
        %1018 = vrot.lane.b32.xlu0 %v698, 15
        %v1019 = vpop.permute.xlu0 %1018
        %1020 = vrot.lane.b32.xlu0 %v700, 15
        %v1021 = vpop.permute.xlu0 %1020
        %1022 = vrot.lane.b32.xlu0 %v702, 15
        %v1023 = vpop.permute.xlu0 %1022
        %1024 = vrot.lane.b32.xlu0 %v704, 15
        %v1025 = vpop.permute.xlu0 %1024
        %1026 = vrot.lane.b32.xlu0 %v706, 15
        %v1027 = vpop.permute.xlu0 %1026
        %1028 = vrot.lane.b32.xlu0 %v708, 15
        %v1029 = vpop.permute.xlu0 %1028
        %1030 = vrot.lane.b32.xlu0 %v710, 15
        %v1031 = vpop.permute.xlu0 %1030
        %1032 = vrot.lane.b32.xlu0 %v712, 15
        %v1033 = vpop.permute.xlu0 %1032
        %vm1034 = vcmp.lt.s32.totalorder %v746, 15
        %v1035 = vsel %vm1034, %v1003, %v1019
        %v1036 = vsel %vm1034, %v1005, %v1021
        %v1037 = vsel %vm1034, %v1007, %v1023
        %v1038 = vsel %vm1034, %v1009, %v1025
        %v1039 = vsel %vm1034, %v1011, %v1027
        %v1040 = vsel %vm1034, %v1013, %v1029
        %v1041 = vsel %vm1034, %v1015, %v1031
        %v1042 = vsel %vm1034, %v1017, %v1033
        %v1043 = vsel %vm1034, %v1019, %v1003
        %v1044 = vsel %vm1034, %v1021, %v1005
        %v1045 = vsel %vm1034, %v1023, %v1007
        %v1046 = vsel %vm1034, %v1025, %v1009
        %v1047 = vsel %vm1034, %v1027, %v1011
        %v1048 = vsel %vm1034, %v1029, %v1013
        %v1049 = vsel %vm1034, %v1031, %v1015
        %v1050 = vsel %vm1034, %v1033, %v1017
        %s1051 = scalar_lea.vmem %s5, 2
        %v1052 = vld [vmem:[%s1051] ss:$8 sm:$0x3]
        %1053 = vset.pattern.permute.xlu0 2
        %1054 = vperm.xlu0 %1053, %v764
        %v1055 = vpop.permute.xlu0 %1054
        %1057 = vset.pattern.permute.xlu0 2
        %1058 = vperm.xlu0 %1057, %v765
        %v1059 = vpop.permute.xlu0 %1058
        %1061 = vset.pattern.permute.xlu0 2
        %1062 = vperm.xlu0 %1061, %v766
        %v1063 = vpop.permute.xlu0 %1062
        %1065 = vset.pattern.permute.xlu0 2
        %1066 = vperm.xlu0 %1065, %v767
        %v1067 = vpop.permute.xlu0 %1066
        %1069 = vset.pattern.permute.xlu0 2
        %1070 = vperm.xlu0 %1069, %v768
        %v1071 = vpop.permute.xlu0 %1070
        %1073 = vset.pattern.permute.xlu0 2
        %1074 = vperm.xlu0 %1073, %v769
        %v1075 = vpop.permute.xlu0 %1074
        %1077 = vset.pattern.permute.xlu0 2
        %1078 = vperm.xlu0 %1077, %v770
        %v1079 = vpop.permute.xlu0 %1078
        %1081 = vset.pattern.permute.xlu0 2
        %1082 = vperm.xlu0 %1081, %v771
        %v1083 = vpop.permute.xlu0 %1082
        %v1086 = vperm.slane %v1052, 0
        %v1087 = vperm.slane %v1052, 1
        %v1090 = vmul.f32 %v1055, %v1086
        %v1091 = vmul.f32 %v1055, %v1087
        %v1092 = vmul.f32 %v1059, %v1086
        %v1093 = vmul.f32 %v1059, %v1087
        %v1094 = vmul.f32 %v1063, %v1086
        %v1095 = vmul.f32 %v1063, %v1087
        %v1096 = vmul.f32 %v1067, %v1086
        %v1097 = vmul.f32 %v1067, %v1087
        %v1098 = vmul.f32 %v1071, %v1086
        %v1099 = vmul.f32 %v1071, %v1087
        %v1100 = vmul.f32 %v1075, %v1086
        %v1101 = vmul.f32 %v1075, %v1087
        %v1102 = vmul.f32 %v1079, %v1086
        %v1103 = vmul.f32 %v1079, %v1087
        %v1104 = vmul.f32 %v1083, %v1086
        %v1105 = vmul.f32 %v1083, %v1087
        %v1106 = vmul.f32 %v1043, %v1090
        %v1107 = vmul.f32 %v1035, %v1091
        %v1108 = vmul.f32 %v1044, %v1092
        %v1109 = vmul.f32 %v1036, %v1093
        %v1110 = vmul.f32 %v1045, %v1094
        %v1111 = vmul.f32 %v1037, %v1095
        %v1112 = vmul.f32 %v1046, %v1096
        %v1113 = vmul.f32 %v1038, %v1097
        %v1114 = vmul.f32 %v1047, %v1098
        %v1115 = vmul.f32 %v1039, %v1099
        %v1116 = vmul.f32 %v1048, %v1100
        %v1117 = vmul.f32 %v1040, %v1101
        %v1118 = vmul.f32 %v1049, %v1102
        %v1119 = vmul.f32 %v1041, %v1103
        %v1120 = vmul.f32 %v1050, %v1104
        %v1121 = vmul.f32 %v1042, %v1105
        %v1122 = vadd.f32 %v986, %v1106
        %v1123 = vadd.f32 %v987, %v1107
        %v1124 = vadd.f32 %v988, %v1108
        %v1125 = vadd.f32 %v989, %v1109
        %v1126 = vadd.f32 %v990, %v1110
        %v1127 = vadd.f32 %v991, %v1111
        %v1128 = vadd.f32 %v992, %v1112
        %v1129 = vadd.f32 %v993, %v1113
        %v1130 = vadd.f32 %v994, %v1114
        %v1131 = vadd.f32 %v995, %v1115
        %v1132 = vadd.f32 %v996, %v1116
        %v1133 = vadd.f32 %v997, %v1117
        %v1134 = vadd.f32 %v998, %v1118
        %v1135 = vadd.f32 %v999, %v1119
        %v1136 = vadd.f32 %v1000, %v1120
        %v1137 = vadd.f32 %v1001, %v1121
        %1138 = vrot.lane.b32.xlu0 %v697, 1
        %v1139 = vpop.permute.xlu0 %1138
        %1140 = vrot.lane.b32.xlu0 %v699, 1
        %v1141 = vpop.permute.xlu0 %1140
        %1142 = vrot.lane.b32.xlu0 %v701, 1
        %v1143 = vpop.permute.xlu0 %1142
        %1144 = vrot.lane.b32.xlu0 %v703, 1
        %v1145 = vpop.permute.xlu0 %1144
        %1146 = vrot.lane.b32.xlu0 %v705, 1
        %v1147 = vpop.permute.xlu0 %1146
        %1148 = vrot.lane.b32.xlu0 %v707, 1
        %v1149 = vpop.permute.xlu0 %1148
        %1150 = vrot.lane.b32.xlu0 %v709, 1
        %v1151 = vpop.permute.xlu0 %1150
        %1152 = vrot.lane.b32.xlu0 %v711, 1
        %v1153 = vpop.permute.xlu0 %1152
        %1154 = vrot.lane.b32.xlu0 %v698, 1
        %v1155 = vpop.permute.xlu0 %1154
        %1156 = vrot.lane.b32.xlu0 %v700, 1
        %v1157 = vpop.permute.xlu0 %1156
        %1158 = vrot.lane.b32.xlu0 %v702, 1
        %v1159 = vpop.permute.xlu0 %1158
        %1160 = vrot.lane.b32.xlu0 %v704, 1
        %v1161 = vpop.permute.xlu0 %1160
        %1162 = vrot.lane.b32.xlu0 %v706, 1
        %v1163 = vpop.permute.xlu0 %1162
        %1164 = vrot.lane.b32.xlu0 %v708, 1
        %v1165 = vpop.permute.xlu0 %1164
        %1166 = vrot.lane.b32.xlu0 %v710, 1
        %v1167 = vpop.permute.xlu0 %1166
        %1168 = vrot.lane.b32.xlu0 %v712, 1
        %v1169 = vpop.permute.xlu0 %1168
        %vm1170 = vcmp.lt.s32.totalorder %v746, 1
        %v1171 = vsel %vm1170, %v1139, %v1155
        %v1172 = vsel %vm1170, %v1141, %v1157
        %v1173 = vsel %vm1170, %v1143, %v1159
        %v1174 = vsel %vm1170, %v1145, %v1161
        %v1175 = vsel %vm1170, %v1147, %v1163
        %v1176 = vsel %vm1170, %v1149, %v1165
        %v1177 = vsel %vm1170, %v1151, %v1167
        %v1178 = vsel %vm1170, %v1153, %v1169
        %v1179 = vsel %vm1170, %v1155, %v1139
        %v1180 = vsel %vm1170, %v1157, %v1141
        %v1181 = vsel %vm1170, %v1159, %v1143
        %v1182 = vsel %vm1170, %v1161, %v1145
        %v1183 = vsel %vm1170, %v1163, %v1147
        %v1184 = vsel %vm1170, %v1165, %v1149
        %v1185 = vsel %vm1170, %v1167, %v1151
        %v1186 = vsel %vm1170, %v1169, %v1153
        %s1187 = scalar_lea.vmem %s5, 3
        %v1188 = vld [vmem:[%s1187] ss:$8 sm:$0x3]
        %1189 = vset.pattern.permute.xlu0 3
        %1190 = vperm.xlu0 %1189, %v764
        %v1191 = vpop.permute.xlu0 %1190
        %1193 = vset.pattern.permute.xlu0 3
        %1194 = vperm.xlu0 %1193, %v765
        %v1195 = vpop.permute.xlu0 %1194
        %1197 = vset.pattern.permute.xlu0 3
        %1198 = vperm.xlu0 %1197, %v766
        %v1199 = vpop.permute.xlu0 %1198
        %1201 = vset.pattern.permute.xlu0 3
        %1202 = vperm.xlu0 %1201, %v767
        %v1203 = vpop.permute.xlu0 %1202
        %1205 = vset.pattern.permute.xlu0 3
        %1206 = vperm.xlu0 %1205, %v768
        %v1207 = vpop.permute.xlu0 %1206
        %1209 = vset.pattern.permute.xlu0 3
        %1210 = vperm.xlu0 %1209, %v769
        %v1211 = vpop.permute.xlu0 %1210
        %1213 = vset.pattern.permute.xlu0 3
        %1214 = vperm.xlu0 %1213, %v770
        %v1215 = vpop.permute.xlu0 %1214
        %1217 = vset.pattern.permute.xlu0 3
        %1218 = vperm.xlu0 %1217, %v771
        %v1219 = vpop.permute.xlu0 %1218
        %v1222 = vperm.slane %v1188, 0
        %v1223 = vperm.slane %v1188, 1
        %v1226 = vmul.f32 %v1191, %v1222
        %v1227 = vmul.f32 %v1191, %v1223
        %v1228 = vmul.f32 %v1195, %v1222
        %v1229 = vmul.f32 %v1195, %v1223
        %v1230 = vmul.f32 %v1199, %v1222
        %v1231 = vmul.f32 %v1199, %v1223
        %v1232 = vmul.f32 %v1203, %v1222
        %v1233 = vmul.f32 %v1203, %v1223
        %v1234 = vmul.f32 %v1207, %v1222
        %v1235 = vmul.f32 %v1207, %v1223
        %v1236 = vmul.f32 %v1211, %v1222
        %v1237 = vmul.f32 %v1211, %v1223
        %v1238 = vmul.f32 %v1215, %v1222
        %v1239 = vmul.f32 %v1215, %v1223
        %v1240 = vmul.f32 %v1219, %v1222
        %v1241 = vmul.f32 %v1219, %v1223
        %v1242 = vmul.f32 %v1179, %v1226
        %v1243 = vmul.f32 %v1171, %v1227
        %v1244 = vmul.f32 %v1180, %v1228
        %v1245 = vmul.f32 %v1172, %v1229
        %v1246 = vmul.f32 %v1181, %v1230
        %v1247 = vmul.f32 %v1173, %v1231
        %v1248 = vmul.f32 %v1182, %v1232
        %v1249 = vmul.f32 %v1174, %v1233
        %v1250 = vmul.f32 %v1183, %v1234
        %v1251 = vmul.f32 %v1175, %v1235
        %v1252 = vmul.f32 %v1184, %v1236
        %v1253 = vmul.f32 %v1176, %v1237
        %v1254 = vmul.f32 %v1185, %v1238
        %v1255 = vmul.f32 %v1177, %v1239
        %v1256 = vmul.f32 %v1186, %v1240
        %v1257 = vmul.f32 %v1178, %v1241
        %v1258 = vadd.f32 %v1122, %v1242
        %v1259 = vadd.f32 %v1123, %v1243
        %v1260 = vadd.f32 %v1124, %v1244
        %v1261 = vadd.f32 %v1125, %v1245
        %v1262 = vadd.f32 %v1126, %v1246
        %v1263 = vadd.f32 %v1127, %v1247
        %v1264 = vadd.f32 %v1128, %v1248
        %v1265 = vadd.f32 %v1129, %v1249
        %v1266 = vadd.f32 %v1130, %v1250
        %v1267 = vadd.f32 %v1131, %v1251
        %v1268 = vadd.f32 %v1132, %v1252
        %v1269 = vadd.f32 %v1133, %v1253
        %v1270 = vadd.f32 %v1134, %v1254
        %v1271 = vadd.f32 %v1135, %v1255
        %v1272 = vadd.f32 %v1136, %v1256
        %v1273 = vadd.f32 %v1137, %v1257
        %s1274 = scalar_lea.vmem %s5, 4
        %v1275 = vld [vmem:[%s1274] ss:$8 sm:$0x3]
        %1276 = vset.pattern.permute.xlu0 4
        %1277 = vperm.xlu0 %1276, %v764
        %v1278 = vpop.permute.xlu0 %1277
        %1280 = vset.pattern.permute.xlu0 4
        %1281 = vperm.xlu0 %1280, %v765
        %v1282 = vpop.permute.xlu0 %1281
        %1284 = vset.pattern.permute.xlu0 4
        %1285 = vperm.xlu0 %1284, %v766
        %v1286 = vpop.permute.xlu0 %1285
        %1288 = vset.pattern.permute.xlu0 4
        %1289 = vperm.xlu0 %1288, %v767
        %v1290 = vpop.permute.xlu0 %1289
        %1292 = vset.pattern.permute.xlu0 4
        %1293 = vperm.xlu0 %1292, %v768
        %v1294 = vpop.permute.xlu0 %1293
        %1296 = vset.pattern.permute.xlu0 4
        %1297 = vperm.xlu0 %1296, %v769
        %v1298 = vpop.permute.xlu0 %1297
        %1300 = vset.pattern.permute.xlu0 4
        %1301 = vperm.xlu0 %1300, %v770
        %v1302 = vpop.permute.xlu0 %1301
        %1304 = vset.pattern.permute.xlu0 4
        %1305 = vperm.xlu0 %1304, %v771
        %v1306 = vpop.permute.xlu0 %1305
        %v1309 = vperm.slane %v1275, 0
        %v1310 = vperm.slane %v1275, 1
        %v1313 = vmul.f32 %v1278, %v1309
        %v1314 = vmul.f32 %v1278, %v1310
        %v1315 = vmul.f32 %v1282, %v1309
        %v1316 = vmul.f32 %v1282, %v1310
        %v1317 = vmul.f32 %v1286, %v1309
        %v1318 = vmul.f32 %v1286, %v1310
        %v1319 = vmul.f32 %v1290, %v1309
        %v1320 = vmul.f32 %v1290, %v1310
        %v1321 = vmul.f32 %v1294, %v1309
        %v1322 = vmul.f32 %v1294, %v1310
        %v1323 = vmul.f32 %v1298, %v1309
        %v1324 = vmul.f32 %v1298, %v1310
        %v1325 = vmul.f32 %v1302, %v1309
        %v1326 = vmul.f32 %v1302, %v1310
        %v1327 = vmul.f32 %v1306, %v1309
        %v1328 = vmul.f32 %v1306, %v1310
        %v1329 = vmul.f32 %v697, %v1313
        %v1330 = vmul.f32 %v698, %v1314
        %v1331 = vmul.f32 %v699, %v1315
        %v1332 = vmul.f32 %v700, %v1316
        %v1333 = vmul.f32 %v701, %v1317
        %v1334 = vmul.f32 %v702, %v1318
        %v1335 = vmul.f32 %v703, %v1319
        %v1336 = vmul.f32 %v704, %v1320
        %v1337 = vmul.f32 %v705, %v1321
        %v1338 = vmul.f32 %v706, %v1322
        %v1339 = vmul.f32 %v707, %v1323
        %v1340 = vmul.f32 %v708, %v1324
        %v1341 = vmul.f32 %v709, %v1325
        %v1342 = vmul.f32 %v710, %v1326
        %v1343 = vmul.f32 %v711, %v1327
        %v1344 = vmul.f32 %v712, %v1328
        %v1345 = vadd.f32 %v1258, %v1329
        %v1346 = vadd.f32 %v1259, %v1330
        %v1347 = vadd.f32 %v1260, %v1331
        %v1348 = vadd.f32 %v1261, %v1332
        %v1349 = vadd.f32 %v1262, %v1333
        %v1350 = vadd.f32 %v1263, %v1334
        %v1351 = vadd.f32 %v1264, %v1335
        %v1352 = vadd.f32 %v1265, %v1336
        %v1353 = vadd.f32 %v1266, %v1337
        %v1354 = vadd.f32 %v1267, %v1338
        %v1355 = vadd.f32 %v1268, %v1339
        %v1356 = vadd.f32 %v1269, %v1340
        %v1357 = vadd.f32 %v1270, %v1341
        %v1358 = vadd.f32 %v1271, %v1342
        %v1359 = vadd.f32 %v1272, %v1343
        %v1360 = vadd.f32 %v1273, %v1344
        %1361 = vrot.lane.b32.xlu0 %v697, 127
        %v1362 = vpop.permute.xlu0 %1361
        %1363 = vrot.lane.b32.xlu0 %v699, 127
        %v1364 = vpop.permute.xlu0 %1363
        %1365 = vrot.lane.b32.xlu0 %v701, 127
        %v1366 = vpop.permute.xlu0 %1365
        %1367 = vrot.lane.b32.xlu0 %v703, 127
        %v1368 = vpop.permute.xlu0 %1367
        %1369 = vrot.lane.b32.xlu0 %v705, 127
        %v1370 = vpop.permute.xlu0 %1369
        %1371 = vrot.lane.b32.xlu0 %v707, 127
        %v1372 = vpop.permute.xlu0 %1371
        %1373 = vrot.lane.b32.xlu0 %v709, 127
        %v1374 = vpop.permute.xlu0 %1373
        %1375 = vrot.lane.b32.xlu0 %v711, 127
        %v1376 = vpop.permute.xlu0 %1375
        %1377 = vrot.lane.b32.xlu0 %v698, 127
        %v1378 = vpop.permute.xlu0 %1377
        %1379 = vrot.lane.b32.xlu0 %v700, 127
        %v1380 = vpop.permute.xlu0 %1379
        %1381 = vrot.lane.b32.xlu0 %v702, 127
        %v1382 = vpop.permute.xlu0 %1381
        %1383 = vrot.lane.b32.xlu0 %v704, 127
        %v1384 = vpop.permute.xlu0 %1383
        %1385 = vrot.lane.b32.xlu0 %v706, 127
        %v1386 = vpop.permute.xlu0 %1385
        %1387 = vrot.lane.b32.xlu0 %v708, 127
        %v1388 = vpop.permute.xlu0 %1387
        %1389 = vrot.lane.b32.xlu0 %v710, 127
        %v1390 = vpop.permute.xlu0 %1389
        %1391 = vrot.lane.b32.xlu0 %v712, 127
        %v1392 = vpop.permute.xlu0 %1391
        %vm1393 = vcmp.lt.s32.totalorder %v746, 127
        %v1394 = vsel %vm1393, %v1362, %v1378
        %v1395 = vsel %vm1393, %v1364, %v1380
        %v1396 = vsel %vm1393, %v1366, %v1382
        %v1397 = vsel %vm1393, %v1368, %v1384
        %v1398 = vsel %vm1393, %v1370, %v1386
        %v1399 = vsel %vm1393, %v1372, %v1388
        %v1400 = vsel %vm1393, %v1374, %v1390
        %v1401 = vsel %vm1393, %v1376, %v1392
        %v1402 = vsel %vm1393, %v1378, %v1362
        %v1403 = vsel %vm1393, %v1380, %v1364
        %v1404 = vsel %vm1393, %v1382, %v1366
        %v1405 = vsel %vm1393, %v1384, %v1368
        %v1406 = vsel %vm1393, %v1386, %v1370
        %v1407 = vsel %vm1393, %v1388, %v1372
        %v1408 = vsel %vm1393, %v1390, %v1374
        %v1409 = vsel %vm1393, %v1392, %v1376
        %s1410 = scalar_lea.vmem %s5, 5
        %v1411 = vld [vmem:[%s1410] ss:$8 sm:$0x3]
        %1412 = vset.pattern.permute.xlu0 5
        %1413 = vperm.xlu0 %1412, %v764
        %v1414 = vpop.permute.xlu0 %1413
        %1416 = vset.pattern.permute.xlu0 5
        %1417 = vperm.xlu0 %1416, %v765
        %v1418 = vpop.permute.xlu0 %1417
        %1420 = vset.pattern.permute.xlu0 5
        %1421 = vperm.xlu0 %1420, %v766
        %v1422 = vpop.permute.xlu0 %1421
        %1424 = vset.pattern.permute.xlu0 5
        %1425 = vperm.xlu0 %1424, %v767
        %v1426 = vpop.permute.xlu0 %1425
        %1428 = vset.pattern.permute.xlu0 5
        %1429 = vperm.xlu0 %1428, %v768
        %v1430 = vpop.permute.xlu0 %1429
        %1432 = vset.pattern.permute.xlu0 5
        %1433 = vperm.xlu0 %1432, %v769
        %v1434 = vpop.permute.xlu0 %1433
        %1436 = vset.pattern.permute.xlu0 5
        %1437 = vperm.xlu0 %1436, %v770
        %v1438 = vpop.permute.xlu0 %1437
        %1440 = vset.pattern.permute.xlu0 5
        %1441 = vperm.xlu0 %1440, %v771
        %v1442 = vpop.permute.xlu0 %1441
        %v1445 = vperm.slane %v1411, 0
        %v1446 = vperm.slane %v1411, 1
        %v1449 = vmul.f32 %v1414, %v1445
        %v1450 = vmul.f32 %v1414, %v1446
        %v1451 = vmul.f32 %v1418, %v1445
        %v1452 = vmul.f32 %v1418, %v1446
        %v1453 = vmul.f32 %v1422, %v1445
        %v1454 = vmul.f32 %v1422, %v1446
        %v1455 = vmul.f32 %v1426, %v1445
        %v1456 = vmul.f32 %v1426, %v1446
        %v1457 = vmul.f32 %v1430, %v1445
        %v1458 = vmul.f32 %v1430, %v1446
        %v1459 = vmul.f32 %v1434, %v1445
        %v1460 = vmul.f32 %v1434, %v1446
        %v1461 = vmul.f32 %v1438, %v1445
        %v1462 = vmul.f32 %v1438, %v1446
        %v1463 = vmul.f32 %v1442, %v1445
        %v1464 = vmul.f32 %v1442, %v1446
        %v1465 = vmul.f32 %v1394, %v1449
        %v1466 = vmul.f32 %v1402, %v1450
        %v1467 = vmul.f32 %v1395, %v1451
        %v1468 = vmul.f32 %v1403, %v1452
        %v1469 = vmul.f32 %v1396, %v1453
        %v1470 = vmul.f32 %v1404, %v1454
        %v1471 = vmul.f32 %v1397, %v1455
        %v1472 = vmul.f32 %v1405, %v1456
        %v1473 = vmul.f32 %v1398, %v1457
        %v1474 = vmul.f32 %v1406, %v1458
        %v1475 = vmul.f32 %v1399, %v1459
        %v1476 = vmul.f32 %v1407, %v1460
        %v1477 = vmul.f32 %v1400, %v1461
        %v1478 = vmul.f32 %v1408, %v1462
        %v1479 = vmul.f32 %v1401, %v1463
        %v1480 = vmul.f32 %v1409, %v1464
        %v1481 = vadd.f32 %v1345, %v1465
        %v1482 = vadd.f32 %v1346, %v1466
        %v1483 = vadd.f32 %v1347, %v1467
        %v1484 = vadd.f32 %v1348, %v1468
        %v1485 = vadd.f32 %v1349, %v1469
        %v1486 = vadd.f32 %v1350, %v1470
        %v1487 = vadd.f32 %v1351, %v1471
        %v1488 = vadd.f32 %v1352, %v1472
        %v1489 = vadd.f32 %v1353, %v1473
        %v1490 = vadd.f32 %v1354, %v1474
        %v1491 = vadd.f32 %v1355, %v1475
        %v1492 = vadd.f32 %v1356, %v1476
        %v1493 = vadd.f32 %v1357, %v1477
        %v1494 = vadd.f32 %v1358, %v1478
        %v1495 = vadd.f32 %v1359, %v1479
        %v1496 = vadd.f32 %v1360, %v1480
        %1497 = vrot.lane.b32.xlu0 %v697, 113
        %v1498 = vpop.permute.xlu0 %1497
        %1499 = vrot.lane.b32.xlu0 %v699, 113
        %v1500 = vpop.permute.xlu0 %1499
        %1501 = vrot.lane.b32.xlu0 %v701, 113
        %v1502 = vpop.permute.xlu0 %1501
        %1503 = vrot.lane.b32.xlu0 %v703, 113
        %v1504 = vpop.permute.xlu0 %1503
        %1505 = vrot.lane.b32.xlu0 %v705, 113
        %v1506 = vpop.permute.xlu0 %1505
        %1507 = vrot.lane.b32.xlu0 %v707, 113
        %v1508 = vpop.permute.xlu0 %1507
        %1509 = vrot.lane.b32.xlu0 %v709, 113
        %v1510 = vpop.permute.xlu0 %1509
        %1511 = vrot.lane.b32.xlu0 %v711, 113
        %v1512 = vpop.permute.xlu0 %1511
        %1513 = vrot.lane.b32.xlu0 %v698, 113
        %v1514 = vpop.permute.xlu0 %1513
        %1515 = vrot.lane.b32.xlu0 %v700, 113
        %v1516 = vpop.permute.xlu0 %1515
        %1517 = vrot.lane.b32.xlu0 %v702, 113
        %v1518 = vpop.permute.xlu0 %1517
        %1519 = vrot.lane.b32.xlu0 %v704, 113
        %v1520 = vpop.permute.xlu0 %1519
        %1521 = vrot.lane.b32.xlu0 %v706, 113
        %v1522 = vpop.permute.xlu0 %1521
        %1523 = vrot.lane.b32.xlu0 %v708, 113
        %v1524 = vpop.permute.xlu0 %1523
        %1525 = vrot.lane.b32.xlu0 %v710, 113
        %v1526 = vpop.permute.xlu0 %1525
        %1527 = vrot.lane.b32.xlu0 %v712, 113
        %v1528 = vpop.permute.xlu0 %1527
        %vm1529 = vcmp.lt.s32.totalorder %v746, 113
        %v1530 = vsel %vm1529, %v1498, %v1514
        %v1531 = vsel %vm1529, %v1500, %v1516
        %v1532 = vsel %vm1529, %v1502, %v1518
        %v1533 = vsel %vm1529, %v1504, %v1520
        %v1534 = vsel %vm1529, %v1506, %v1522
        %v1535 = vsel %vm1529, %v1508, %v1524
        %v1536 = vsel %vm1529, %v1510, %v1526
        %v1537 = vsel %vm1529, %v1512, %v1528
        %v1538 = vsel %vm1529, %v1514, %v1498
        %v1539 = vsel %vm1529, %v1516, %v1500
        %v1540 = vsel %vm1529, %v1518, %v1502
        %v1541 = vsel %vm1529, %v1520, %v1504
        %v1542 = vsel %vm1529, %v1522, %v1506
        %v1543 = vsel %vm1529, %v1524, %v1508
        %v1544 = vsel %vm1529, %v1526, %v1510
        %v1545 = vsel %vm1529, %v1528, %v1512
        %s1546 = scalar_lea.vmem %s5, 6
        %v1547 = vld [vmem:[%s1546] ss:$8 sm:$0x3]
        %1548 = vset.pattern.permute.xlu0 6
        %1549 = vperm.xlu0 %1548, %v764
        %v1550 = vpop.permute.xlu0 %1549
        %1552 = vset.pattern.permute.xlu0 6
        %1553 = vperm.xlu0 %1552, %v765
        %v1554 = vpop.permute.xlu0 %1553
        %1556 = vset.pattern.permute.xlu0 6
        %1557 = vperm.xlu0 %1556, %v766
        %v1558 = vpop.permute.xlu0 %1557
        %1560 = vset.pattern.permute.xlu0 6
        %1561 = vperm.xlu0 %1560, %v767
        %v1562 = vpop.permute.xlu0 %1561
        %1564 = vset.pattern.permute.xlu0 6
        %1565 = vperm.xlu0 %1564, %v768
        %v1566 = vpop.permute.xlu0 %1565
        %1568 = vset.pattern.permute.xlu0 6
        %1569 = vperm.xlu0 %1568, %v769
        %v1570 = vpop.permute.xlu0 %1569
        %1572 = vset.pattern.permute.xlu0 6
        %1573 = vperm.xlu0 %1572, %v770
        %v1574 = vpop.permute.xlu0 %1573
        %1576 = vset.pattern.permute.xlu0 6
        %1577 = vperm.xlu0 %1576, %v771
        %v1578 = vpop.permute.xlu0 %1577
        %v1581 = vperm.slane %v1547, 0
        %v1582 = vperm.slane %v1547, 1
        %v1585 = vmul.f32 %v1550, %v1581
        %v1586 = vmul.f32 %v1550, %v1582
        %v1587 = vmul.f32 %v1554, %v1581
        %v1588 = vmul.f32 %v1554, %v1582
        %v1589 = vmul.f32 %v1558, %v1581
        %v1590 = vmul.f32 %v1558, %v1582
        %v1591 = vmul.f32 %v1562, %v1581
        %v1592 = vmul.f32 %v1562, %v1582
        %v1593 = vmul.f32 %v1566, %v1581
        %v1594 = vmul.f32 %v1566, %v1582
        %v1595 = vmul.f32 %v1570, %v1581
        %v1596 = vmul.f32 %v1570, %v1582
        %v1597 = vmul.f32 %v1574, %v1581
        %v1598 = vmul.f32 %v1574, %v1582
        %v1599 = vmul.f32 %v1578, %v1581
        %v1600 = vmul.f32 %v1578, %v1582
        %v1601 = vmul.f32 %v1530, %v1585
        %v1602 = vmul.f32 %v1538, %v1586
        %v1603 = vmul.f32 %v1531, %v1587
        %v1604 = vmul.f32 %v1539, %v1588
        %v1605 = vmul.f32 %v1532, %v1589
        %v1606 = vmul.f32 %v1540, %v1590
        %v1607 = vmul.f32 %v1533, %v1591
        %v1608 = vmul.f32 %v1541, %v1592
        %v1609 = vmul.f32 %v1534, %v1593
        %v1610 = vmul.f32 %v1542, %v1594
        %v1611 = vmul.f32 %v1535, %v1595
        %v1612 = vmul.f32 %v1543, %v1596
        %v1613 = vmul.f32 %v1536, %v1597
        %v1614 = vmul.f32 %v1544, %v1598
        %v1615 = vmul.f32 %v1537, %v1599
        %v1616 = vmul.f32 %v1545, %v1600
        %v1617 = vadd.f32 %v1481, %v1601
        %v1618 = vadd.f32 %v1482, %v1602
        %v1619 = vadd.f32 %v1483, %v1603
        %v1620 = vadd.f32 %v1484, %v1604
        %v1621 = vadd.f32 %v1485, %v1605
        %v1622 = vadd.f32 %v1486, %v1606
        %v1623 = vadd.f32 %v1487, %v1607
        %v1624 = vadd.f32 %v1488, %v1608
        %v1625 = vadd.f32 %v1489, %v1609
        %v1626 = vadd.f32 %v1490, %v1610
        %v1627 = vadd.f32 %v1491, %v1611
        %v1628 = vadd.f32 %v1492, %v1612
        %v1629 = vadd.f32 %v1493, %v1613
        %v1630 = vadd.f32 %v1494, %v1614
        %v1631 = vadd.f32 %v1495, %v1615
        %v1632 = vadd.f32 %v1496, %v1616
        %1633 = vrot.lane.b32.xlu0 %v697, 112
        %v1634 = vpop.permute.xlu0 %1633
        %1635 = vrot.lane.b32.xlu0 %v699, 112
        %v1636 = vpop.permute.xlu0 %1635
        %1637 = vrot.lane.b32.xlu0 %v701, 112
        %v1638 = vpop.permute.xlu0 %1637
        %1639 = vrot.lane.b32.xlu0 %v703, 112
        %v1640 = vpop.permute.xlu0 %1639
        %1641 = vrot.lane.b32.xlu0 %v705, 112
        %v1642 = vpop.permute.xlu0 %1641
        %1643 = vrot.lane.b32.xlu0 %v707, 112
        %v1644 = vpop.permute.xlu0 %1643
        %1645 = vrot.lane.b32.xlu0 %v709, 112
        %v1646 = vpop.permute.xlu0 %1645
        %1647 = vrot.lane.b32.xlu0 %v711, 112
        %v1648 = vpop.permute.xlu0 %1647
        %1649 = vrot.lane.b32.xlu0 %v698, 112
        %v1650 = vpop.permute.xlu0 %1649
        %1651 = vrot.lane.b32.xlu0 %v700, 112
        %v1652 = vpop.permute.xlu0 %1651
        %1653 = vrot.lane.b32.xlu0 %v702, 112
        %v1654 = vpop.permute.xlu0 %1653
        %1655 = vrot.lane.b32.xlu0 %v704, 112
        %v1656 = vpop.permute.xlu0 %1655
        %1657 = vrot.lane.b32.xlu0 %v706, 112
        %v1658 = vpop.permute.xlu0 %1657
        %1659 = vrot.lane.b32.xlu0 %v708, 112
        %v1660 = vpop.permute.xlu0 %1659
        %1661 = vrot.lane.b32.xlu0 %v710, 112
        %v1662 = vpop.permute.xlu0 %1661
        %1663 = vrot.lane.b32.xlu0 %v712, 112
        %v1664 = vpop.permute.xlu0 %1663
        %vm1665 = vcmp.lt.s32.totalorder %v746, 112
        %v1666 = vsel %vm1665, %v1634, %v1650
        %v1667 = vsel %vm1665, %v1636, %v1652
        %v1668 = vsel %vm1665, %v1638, %v1654
        %v1669 = vsel %vm1665, %v1640, %v1656
        %v1670 = vsel %vm1665, %v1642, %v1658
        %v1671 = vsel %vm1665, %v1644, %v1660
        %v1672 = vsel %vm1665, %v1646, %v1662
        %v1673 = vsel %vm1665, %v1648, %v1664
        %v1674 = vsel %vm1665, %v1650, %v1634
        %v1675 = vsel %vm1665, %v1652, %v1636
        %v1676 = vsel %vm1665, %v1654, %v1638
        %v1677 = vsel %vm1665, %v1656, %v1640
        %v1678 = vsel %vm1665, %v1658, %v1642
        %v1679 = vsel %vm1665, %v1660, %v1644
        %v1680 = vsel %vm1665, %v1662, %v1646
        %v1681 = vsel %vm1665, %v1664, %v1648
        %s1682 = scalar_lea.vmem %s5, 7
        %v1683 = vld [vmem:[%s1682] ss:$8 sm:$0x3]
        %1684 = vset.pattern.permute.xlu0 7
        %1685 = vperm.xlu0 %1684, %v764
        %v1686 = vpop.permute.xlu0 %1685
        %1688 = vset.pattern.permute.xlu0 7
        %1689 = vperm.xlu0 %1688, %v765
        %v1690 = vpop.permute.xlu0 %1689
        %1692 = vset.pattern.permute.xlu0 7
        %1693 = vperm.xlu0 %1692, %v766
        %v1694 = vpop.permute.xlu0 %1693
        %1696 = vset.pattern.permute.xlu0 7
        %1697 = vperm.xlu0 %1696, %v767
        %v1698 = vpop.permute.xlu0 %1697
        %1700 = vset.pattern.permute.xlu0 7
        %1701 = vperm.xlu0 %1700, %v768
        %v1702 = vpop.permute.xlu0 %1701
        %1704 = vset.pattern.permute.xlu0 7
        %1705 = vperm.xlu0 %1704, %v769
        %v1706 = vpop.permute.xlu0 %1705
        %1708 = vset.pattern.permute.xlu0 7
        %1709 = vperm.xlu0 %1708, %v770
        %v1710 = vpop.permute.xlu0 %1709
        %1712 = vset.pattern.permute.xlu0 7
        %1713 = vperm.xlu0 %1712, %v771
        %v1714 = vpop.permute.xlu0 %1713
        %v1717 = vperm.slane %v1683, 0
        %v1718 = vperm.slane %v1683, 1
        %v1721 = vmul.f32 %v1686, %v1717
        %v1722 = vmul.f32 %v1686, %v1718
        %v1723 = vmul.f32 %v1690, %v1717
        %v1724 = vmul.f32 %v1690, %v1718
        %v1725 = vmul.f32 %v1694, %v1717
        %v1726 = vmul.f32 %v1694, %v1718
        %v1727 = vmul.f32 %v1698, %v1717
        %v1728 = vmul.f32 %v1698, %v1718
        %v1729 = vmul.f32 %v1702, %v1717
        %v1730 = vmul.f32 %v1702, %v1718
        %v1731 = vmul.f32 %v1706, %v1717
        %v1732 = vmul.f32 %v1706, %v1718
        %v1733 = vmul.f32 %v1710, %v1717
        %v1734 = vmul.f32 %v1710, %v1718
        %v1735 = vmul.f32 %v1714, %v1717
        %v1736 = vmul.f32 %v1714, %v1718
        %v1737 = vmul.f32 %v1666, %v1721
        %v1738 = vmul.f32 %v1674, %v1722
        %v1739 = vmul.f32 %v1667, %v1723
        %v1740 = vmul.f32 %v1675, %v1724
        %v1741 = vmul.f32 %v1668, %v1725
        %v1742 = vmul.f32 %v1676, %v1726
        %v1743 = vmul.f32 %v1669, %v1727
        %v1744 = vmul.f32 %v1677, %v1728
        %v1745 = vmul.f32 %v1670, %v1729
        %v1746 = vmul.f32 %v1678, %v1730
        %v1747 = vmul.f32 %v1671, %v1731
        %v1748 = vmul.f32 %v1679, %v1732
        %v1749 = vmul.f32 %v1672, %v1733
        %v1750 = vmul.f32 %v1680, %v1734
        %v1751 = vmul.f32 %v1673, %v1735
        %v1752 = vmul.f32 %v1681, %v1736
        %v1753 = vadd.f32 %v1617, %v1737
        %v1754 = vadd.f32 %v1618, %v1738
        %v1755 = vadd.f32 %v1619, %v1739
        %v1756 = vadd.f32 %v1620, %v1740
        %v1757 = vadd.f32 %v1621, %v1741
        %v1758 = vadd.f32 %v1622, %v1742
        %v1759 = vadd.f32 %v1623, %v1743
        %v1760 = vadd.f32 %v1624, %v1744
        %v1761 = vadd.f32 %v1625, %v1745
        %v1762 = vadd.f32 %v1626, %v1746
        %v1763 = vadd.f32 %v1627, %v1747
        %v1764 = vadd.f32 %v1628, %v1748
        %v1765 = vadd.f32 %v1629, %v1749
        %v1766 = vadd.f32 %v1630, %v1750
        %v1767 = vadd.f32 %v1631, %v1751
        %v1768 = vadd.f32 %v1632, %v1752
        %1769 = vrot.lane.b32.xlu0 %v697, 111
        %v1770 = vpop.permute.xlu0 %1769
        %1771 = vrot.lane.b32.xlu0 %v699, 111
        %v1772 = vpop.permute.xlu0 %1771
        %1773 = vrot.lane.b32.xlu0 %v701, 111
        %v1774 = vpop.permute.xlu0 %1773
        %1775 = vrot.lane.b32.xlu0 %v703, 111
        %v1776 = vpop.permute.xlu0 %1775
        %1777 = vrot.lane.b32.xlu0 %v705, 111
        %v1778 = vpop.permute.xlu0 %1777
        %1779 = vrot.lane.b32.xlu0 %v707, 111
        %v1780 = vpop.permute.xlu0 %1779
        %1781 = vrot.lane.b32.xlu0 %v709, 111
        %v1782 = vpop.permute.xlu0 %1781
        %1783 = vrot.lane.b32.xlu0 %v711, 111
        %v1784 = vpop.permute.xlu0 %1783
        %1785 = vrot.lane.b32.xlu0 %v698, 111
        %v1786 = vpop.permute.xlu0 %1785
        %1787 = vrot.lane.b32.xlu0 %v700, 111
        %v1788 = vpop.permute.xlu0 %1787
        %1789 = vrot.lane.b32.xlu0 %v702, 111
        %v1790 = vpop.permute.xlu0 %1789
        %1791 = vrot.lane.b32.xlu0 %v704, 111
        %v1792 = vpop.permute.xlu0 %1791
        %1793 = vrot.lane.b32.xlu0 %v706, 111
        %v1794 = vpop.permute.xlu0 %1793
        %1795 = vrot.lane.b32.xlu0 %v708, 111
        %v1796 = vpop.permute.xlu0 %1795
        %1797 = vrot.lane.b32.xlu0 %v710, 111
        %v1798 = vpop.permute.xlu0 %1797
        %1799 = vrot.lane.b32.xlu0 %v712, 111
        %v1800 = vpop.permute.xlu0 %1799
        %vm1801 = vcmp.lt.s32.totalorder %v746, 111
        %v1802 = vsel %vm1801, %v1770, %v1786
        %v1803 = vsel %vm1801, %v1772, %v1788
        %v1804 = vsel %vm1801, %v1774, %v1790
        %v1805 = vsel %vm1801, %v1776, %v1792
        %v1806 = vsel %vm1801, %v1778, %v1794
        %v1807 = vsel %vm1801, %v1780, %v1796
        %v1808 = vsel %vm1801, %v1782, %v1798
        %v1809 = vsel %vm1801, %v1784, %v1800
        %v1810 = vsel %vm1801, %v1786, %v1770
        %v1811 = vsel %vm1801, %v1788, %v1772
        %v1812 = vsel %vm1801, %v1790, %v1774
        %v1813 = vsel %vm1801, %v1792, %v1776
        %v1814 = vsel %vm1801, %v1794, %v1778
        %v1815 = vsel %vm1801, %v1796, %v1780
        %v1816 = vsel %vm1801, %v1798, %v1782
        %v1817 = vsel %vm1801, %v1800, %v1784
        %s1818 = scalar_lea.vmem %s5, 16
        %v1819 = vld [vmem:[%s1818] ss:$8 sm:$0x3]
        %1820 = vset.pattern.permute.xlu0 8
        %1821 = vperm.xlu0 %1820, %v764
        %v1822 = vpop.permute.xlu0 %1821
        %1824 = vset.pattern.permute.xlu0 8
        %1825 = vperm.xlu0 %1824, %v765
        %v1826 = vpop.permute.xlu0 %1825
        %1828 = vset.pattern.permute.xlu0 8
        %1829 = vperm.xlu0 %1828, %v766
        %v1830 = vpop.permute.xlu0 %1829
        %1832 = vset.pattern.permute.xlu0 8
        %1833 = vperm.xlu0 %1832, %v767
        %v1834 = vpop.permute.xlu0 %1833
        %1836 = vset.pattern.permute.xlu0 8
        %1837 = vperm.xlu0 %1836, %v768
        %v1838 = vpop.permute.xlu0 %1837
        %1840 = vset.pattern.permute.xlu0 8
        %1841 = vperm.xlu0 %1840, %v769
        %v1842 = vpop.permute.xlu0 %1841
        %1844 = vset.pattern.permute.xlu0 8
        %1845 = vperm.xlu0 %1844, %v770
        %v1846 = vpop.permute.xlu0 %1845
        %1848 = vset.pattern.permute.xlu0 8
        %1849 = vperm.xlu0 %1848, %v771
        %v1850 = vpop.permute.xlu0 %1849
        %v1853 = vperm.slane %v1819, 0
        %v1854 = vperm.slane %v1819, 1
        %v1857 = vmul.f32 %v1822, %v1853
        %v1858 = vmul.f32 %v1822, %v1854
        %v1859 = vmul.f32 %v1826, %v1853
        %v1860 = vmul.f32 %v1826, %v1854
        %v1861 = vmul.f32 %v1830, %v1853
        %v1862 = vmul.f32 %v1830, %v1854
        %v1863 = vmul.f32 %v1834, %v1853
        %v1864 = vmul.f32 %v1834, %v1854
        %v1865 = vmul.f32 %v1838, %v1853
        %v1866 = vmul.f32 %v1838, %v1854
        %v1867 = vmul.f32 %v1842, %v1853
        %v1868 = vmul.f32 %v1842, %v1854
        %v1869 = vmul.f32 %v1846, %v1853
        %v1870 = vmul.f32 %v1846, %v1854
        %v1871 = vmul.f32 %v1850, %v1853
        %v1872 = vmul.f32 %v1850, %v1854
        %v1873 = vmul.f32 %v1802, %v1857
        %v1874 = vmul.f32 %v1810, %v1858
        %v1875 = vmul.f32 %v1803, %v1859
        %v1876 = vmul.f32 %v1811, %v1860
        %v1877 = vmul.f32 %v1804, %v1861
        %v1878 = vmul.f32 %v1812, %v1862
        %v1879 = vmul.f32 %v1805, %v1863
        %v1880 = vmul.f32 %v1813, %v1864
        %v1881 = vmul.f32 %v1806, %v1865
        %v1882 = vmul.f32 %v1814, %v1866
        %v1883 = vmul.f32 %v1807, %v1867
        %v1884 = vmul.f32 %v1815, %v1868
        %v1885 = vmul.f32 %v1808, %v1869
        %v1886 = vmul.f32 %v1816, %v1870
        %v1887 = vmul.f32 %v1809, %v1871
        %v1888 = vmul.f32 %v1817, %v1872
        %v1889 = vadd.f32 %v1753, %v1873
        %v1890 = vadd.f32 %v1754, %v1874
        %v1891 = vadd.f32 %v1755, %v1875
        %v1892 = vadd.f32 %v1756, %v1876
        %v1893 = vadd.f32 %v1757, %v1877
        %v1894 = vadd.f32 %v1758, %v1878
        %v1895 = vadd.f32 %v1759, %v1879
        %v1896 = vadd.f32 %v1760, %v1880
        %v1897 = vadd.f32 %v1761, %v1881
        %v1898 = vadd.f32 %v1762, %v1882
        %v1899 = vadd.f32 %v1763, %v1883
        %v1900 = vadd.f32 %v1764, %v1884
        %v1901 = vadd.f32 %v1765, %v1885
        %v1902 = vadd.f32 %v1766, %v1886
        %v1903 = vadd.f32 %v1767, %v1887
        %v1904 = vadd.f32 %v1768, %v1888
        %v1905 = vld [vmem:[%s4] sm:$0xff]
        %v1906 = vld [vmem:[%s4 + $0x8] sm:$0xff]
        %v1907 = vld [vmem:[%s4 + $0x10] sm:$0xff]
        %v1908 = vld [vmem:[%s4 + $0x18] sm:$0xff]
        %v1909 = vld [vmem:[%s4 + $0x20] sm:$0xff]
        %v1910 = vld [vmem:[%s4 + $0x28] sm:$0xff]
        %v1911 = vld [vmem:[%s4 + $0x30] sm:$0xff]
        %v1912 = vld [vmem:[%s4 + $0x38] sm:$0xff]
        %1914 = vset.pattern.permute.xlu0 0
        %1915 = vperm.xlu0 %1914, %v1905
        %v1916 = vpop.permute.xlu0 %1915
        %1919 = vset.pattern.permute.xlu0 0
        %1920 = vperm.xlu0 %1919, %v1906
        %v1921 = vpop.permute.xlu0 %1920
        %1924 = vset.pattern.permute.xlu0 0
        %1925 = vperm.xlu0 %1924, %v1907
        %v1926 = vpop.permute.xlu0 %1925
        %1929 = vset.pattern.permute.xlu0 0
        %1930 = vperm.xlu0 %1929, %v1908
        %v1931 = vpop.permute.xlu0 %1930
        %1934 = vset.pattern.permute.xlu0 0
        %1935 = vperm.xlu0 %1934, %v1909
        %v1936 = vpop.permute.xlu0 %1935
        %1939 = vset.pattern.permute.xlu0 0
        %1940 = vperm.xlu0 %1939, %v1910
        %v1941 = vpop.permute.xlu0 %1940
        %1944 = vset.pattern.permute.xlu0 0
        %1945 = vperm.xlu0 %1944, %v1911
        %v1946 = vpop.permute.xlu0 %1945
        %1949 = vset.pattern.permute.xlu0 0
        %1950 = vperm.xlu0 %1949, %v1912
        %v1951 = vpop.permute.xlu0 %1950
        %v1953 = vadd.f32 %v1889, %v1916
        %v1954 = vadd.f32 %v1890, %v1916
        %v1955 = vadd.f32 %v1891, %v1921
        %v1956 = vadd.f32 %v1892, %v1921
        %v1957 = vadd.f32 %v1893, %v1926
        %v1958 = vadd.f32 %v1894, %v1926
        %v1959 = vadd.f32 %v1895, %v1931
        %v1960 = vadd.f32 %v1896, %v1931
        %v1961 = vadd.f32 %v1897, %v1936
        %v1962 = vadd.f32 %v1898, %v1936
        %v1963 = vadd.f32 %v1899, %v1941
        %v1964 = vadd.f32 %v1900, %v1941
        %v1965 = vadd.f32 %v1901, %v1946
        %v1966 = vadd.f32 %v1902, %v1946
        %v1967 = vadd.f32 %v1903, %v1951
        %v1968 = vadd.f32 %v1904, %v1951
        %v1969 = vld [vmem:[%s6] sm:$0xff]
        %v1970 = vld [vmem:[%s6 + $0x8] sm:$0xff]
        %vm1971 = vcmask 523264
        %v1973 = vsel %vm1971, %v1969, 0
        %v1976 = vsel %vm1971, %v1970, 0
        %1978 = vmatpush.msra.mxu0 0.0
        %1979 = vmatpush.msra.mxu0 0.0
        %1980 = vmatpush.msra.mxu0 0.0
        %1981 = vmatpush.msra.mxu0 0.0
        %1982 = vmatpush.msra.mxu0 0.0
        %1983 = vmatpush.msra.mxu0 0.0
        %1984 = vmatpush.msra.mxu0 0.0
        %1985 = vmatpush.msra.mxu0 0.0
        %1986 = vmatpush.msra.mxu0 %v1967
        %1987 = vmatpush.msra.mxu0 %v1965
        %1988 = vmatpush.msra.mxu0 %v1963
        %1989 = vmatpush.msra.mxu0 %v1961
        %1990 = vmatpush.msra.mxu0 %v1959
        %1991 = vmatpush.msra.mxu0 %v1957
        %1992 = vmatpush.msra.mxu0 %v1955
        %1993 = vmatpush.msra.mxu0 %v1953
        %1994 = vmatmul.f32.gmra.mxu0 %v1973
        %v1995 = vpop.f32.mrf.mxu0
        %v1996 = vadd.f32 0.0, %v1995
        %1997 = vmatmul.f32.gmra.mxu0 %v1976
        %v1998 = vpop.f32.mrf.mxu0
        %v1999 = vadd.f32 0.0, %v1998
        %2000 = vdwg.mxu0
        %2001 = vmatpush.msra.mxu0 0.0
        %2002 = vmatpush.msra.mxu0 0.0
        %2003 = vmatpush.msra.mxu0 0.0
        %2004 = vmatpush.msra.mxu0 0.0
        %2005 = vmatpush.msra.mxu0 0.0
        %2006 = vmatpush.msra.mxu0 0.0
        %2007 = vmatpush.msra.mxu0 0.0
        %2008 = vmatpush.msra.mxu0 0.0
        %2009 = vmatpush.msra.mxu0 %v1968
        %2010 = vmatpush.msra.mxu0 %v1966
        %2011 = vmatpush.msra.mxu0 %v1964
        %2012 = vmatpush.msra.mxu0 %v1962
        %2013 = vmatpush.msra.mxu0 %v1960
        %2014 = vmatpush.msra.mxu0 %v1958
        %2015 = vmatpush.msra.mxu0 %v1956
        %2016 = vmatpush.msra.mxu0 %v1954
        %2017 = vmatmul.f32.gmra.mxu0 %v1973
        %v2018 = vpop.f32.mrf.mxu0
        %v2019 = vadd.f32 0.0, %v2018
        %2020 = vmatmul.f32.gmra.mxu0 %v1976
        %v2021 = vpop.f32.mrf.mxu0
        %v2022 = vadd.f32 0.0, %v2021
        %2023 = vdwg.mxu0
        %v2024 = vadd.f32 %v1996, %v2019
        %2025 = vadd.xlane.f32.xlu0 %v2024
        %v2026 = vpop.xlane.xlu0 %2025
        %v2027 = vadd.f32 %v1999, %v2022
        %2028 = vadd.xlane.f32.xlu0 %v2027
        %v2029 = vpop.xlane.xlu0 %2028
        %v2030 = vmul.f32 %v2026, 0.00390625
        %v2031 = vmul.f32 %v2029, 0.00390625
        %v2032 = vld [vmem:[%s7] sm:$0xff]
        %v2033 = vld [vmem:[%s7 + $0x8] sm:$0xff]
        %v2034 = vadd.f32 %v2030, %v2032
        %v2035 = vadd.f32 %v2031, %v2033
        %v2036 = vmax.f32 %v2034, 0.0
        %v2037 = vmax.f32 %v2035, 0.0
        %2039 = vset.pattern.permute.xlu0 0
        %2040 = vperm.xlu0 %2039, %v2036
        %v2041 = vpop.permute.xlu0 %2040
        %2044 = vset.pattern.permute.xlu0 0
        %2045 = vperm.xlu0 %2044, %v2037
        %v2046 = vpop.permute.xlu0 %2045
        %v2048 = vadd.f32 %v2041, 0.0
        %v2049 = vadd.f32 %v2046, 0.0
        %v2050 = vld [vmem:[%s8] sm:$0xff]
        %v2051 = vld [vmem:[%s8 + $0x8] sm:$0xff]
        %v2052 = vld [vmem:[%s8 + $0x10] sm:$0xff]
        %v2053 = vld [vmem:[%s8 + $0x18] sm:$0xff]
        %v2054 = vld [vmem:[%s8 + $0x20] sm:$0xff]
        %v2055 = vld [vmem:[%s8 + $0x28] sm:$0xff]
        %v2056 = vld [vmem:[%s8 + $0x30] sm:$0xff]
        %v2057 = vld [vmem:[%s8 + $0x38] sm:$0xff]
        %v2058 = vld [vmem:[%s9] sm:$0xff]
        %v2059 = vld [vmem:[%s9 + $0x8] sm:$0xff]
        %v2060 = vld [vmem:[%s9 + $0x10] sm:$0xff]
        %v2061 = vld [vmem:[%s9 + $0x18] sm:$0xff]
        %v2062 = vld [vmem:[%s9 + $0x20] sm:$0xff]
        %v2063 = vld [vmem:[%s9 + $0x28] sm:$0xff]
        %v2064 = vld [vmem:[%s9 + $0x30] sm:$0xff]
        %v2065 = vld [vmem:[%s9 + $0x38] sm:$0xff]
        %2067 = vset.pattern.permute.xlu0 0
        %2068 = vperm.xlu0 %2067, %v2058
        %v2069 = vpop.permute.xlu0 %2068
        %2072 = vset.pattern.permute.xlu0 0
        %2073 = vperm.xlu0 %2072, %v2059
        %v2074 = vpop.permute.xlu0 %2073
        %2077 = vset.pattern.permute.xlu0 0
        %2078 = vperm.xlu0 %2077, %v2060
        %v2079 = vpop.permute.xlu0 %2078
        %2082 = vset.pattern.permute.xlu0 0
        %2083 = vperm.xlu0 %2082, %v2061
        %v2084 = vpop.permute.xlu0 %2083
        %2087 = vset.pattern.permute.xlu0 0
        %2088 = vperm.xlu0 %2087, %v2062
        %v2089 = vpop.permute.xlu0 %2088
        %2092 = vset.pattern.permute.xlu0 0
        %2093 = vperm.xlu0 %2092, %v2063
        %v2094 = vpop.permute.xlu0 %2093
        %2097 = vset.pattern.permute.xlu0 0
        %2098 = vperm.xlu0 %2097, %v2064
        %v2099 = vpop.permute.xlu0 %2098
        %2102 = vset.pattern.permute.xlu0 0
        %2103 = vperm.xlu0 %2102, %v2065
        %v2104 = vpop.permute.xlu0 %2103
        %v2107 = vsel %vm526, %v2050, 0
        %v2110 = vsel %vm526, %v2051, 0
        %v2113 = vsel %vm526, %v2052, 0
        %v2116 = vsel %vm526, %v2053, 0
        %v2119 = vsel %vm526, %v2054, 0
        %v2122 = vsel %vm526, %v2055, 0
        %v2125 = vsel %vm526, %v2056, 0
        %v2128 = vsel %vm526, %v2057, 0
        %2130 = vmatpush.msra.mxu0 0.0
        %2131 = vmatpush.msra.mxu0 0.0
        %2132 = vmatpush.msra.mxu0 0.0
        %2133 = vmatpush.msra.mxu0 0.0
        %2134 = vmatpush.msra.mxu0 0.0
        %2135 = vmatpush.msra.mxu0 0.0
        %2136 = vmatpush.msra.mxu0 0.0
        %2137 = vmatpush.msra.mxu0 0.0
        %2138 = vmatpush.msra.mxu0 0.0
        %2139 = vmatpush.msra.mxu0 0.0
        %2140 = vmatpush.msra.mxu0 0.0
        %2141 = vmatpush.msra.mxu0 0.0
        %2142 = vmatpush.msra.mxu0 0.0
        %2143 = vmatpush.msra.mxu0 0.0
        %2144 = vmatpush.msra.mxu0 %v2049
        %2145 = vmatpush.msra.mxu0 %v2048
        %2146 = vmatmul.f32.gmra.mxu0 %v2107
        %v2147 = vpop.f32.mrf.mxu0
        %v2148 = vadd.f32 %v2069, %v2147
        %2149 = vmatmul.f32.gmra.mxu0 %v2110
        %v2150 = vpop.f32.mrf.mxu0
        %v2151 = vadd.f32 %v2074, %v2150
        %2152 = vmatmul.f32.gmra.mxu0 %v2113
        %v2153 = vpop.f32.mrf.mxu0
        %v2154 = vadd.f32 %v2079, %v2153
        %2155 = vmatmul.f32.gmra.mxu0 %v2116
        %v2156 = vpop.f32.mrf.mxu0
        %v2157 = vadd.f32 %v2084, %v2156
        %2158 = vmatmul.f32.gmra.mxu0 %v2119
        %v2159 = vpop.f32.mrf.mxu0
        %v2160 = vadd.f32 %v2089, %v2159
        %2161 = vmatmul.f32.gmra.mxu0 %v2122
        %v2162 = vpop.f32.mrf.mxu0
        %v2163 = vadd.f32 %v2094, %v2162
        %2164 = vmatmul.f32.gmra.mxu0 %v2125
        %v2165 = vpop.f32.mrf.mxu0
        %v2166 = vadd.f32 %v2099, %v2165
        %2167 = vmatmul.f32.gmra.mxu0 %v2128
        %v2168 = vpop.f32.mrf.mxu0
        %v2169 = vadd.f32 %v2104, %v2168
        %2170 = vdwg.mxu0
        %v2171 = vadd.f32 %v2148, 3.0
        %v2172 = vadd.f32 %v2151, 3.0
        %v2173 = vadd.f32 %v2154, 3.0
        %v2174 = vadd.f32 %v2157, 3.0
        %v2175 = vadd.f32 %v2160, 3.0
        %v2176 = vadd.f32 %v2163, 3.0
        %v2177 = vadd.f32 %v2166, 3.0
        %v2178 = vadd.f32 %v2169, 3.0
        %v2179 = vmax.f32 %v2171, 0.0
        %v2180 = vmax.f32 %v2172, 0.0
        %v2181 = vmax.f32 %v2173, 0.0
        %v2182 = vmax.f32 %v2174, 0.0
        %v2183 = vmax.f32 %v2175, 0.0
        %v2184 = vmax.f32 %v2176, 0.0
        %v2185 = vmax.f32 %v2177, 0.0
        %v2186 = vmax.f32 %v2178, 0.0
        %v2187 = vmin.f32 %v2179, 6.0
        %v2188 = vmin.f32 %v2180, 6.0
        %v2189 = vmin.f32 %v2181, 6.0
        %v2190 = vmin.f32 %v2182, 6.0
        %v2191 = vmin.f32 %v2183, 6.0
        %v2192 = vmin.f32 %v2184, 6.0
        %v2193 = vmin.f32 %v2185, 6.0
        %v2194 = vmin.f32 %v2186, 6.0
        %v2195 = vmul.f32 %v2187, 0.16666667
        %v2196 = vmul.f32 %v2188, 0.16666667
        %v2197 = vmul.f32 %v2189, 0.16666667
        %v2198 = vmul.f32 %v2190, 0.16666667
        %v2199 = vmul.f32 %v2191, 0.16666667
        %v2200 = vmul.f32 %v2192, 0.16666667
        %v2201 = vmul.f32 %v2193, 0.16666667
        %v2202 = vmul.f32 %v2194, 0.16666667
        %v2203 = vmul.f32 %v1953, %v2195
        %v2204 = vmul.f32 %v1954, %v2195
        %v2205 = vmul.f32 %v1955, %v2196
        %v2206 = vmul.f32 %v1956, %v2196
        %v2207 = vmul.f32 %v1957, %v2197
        %v2208 = vmul.f32 %v1958, %v2197
        %v2209 = vmul.f32 %v1959, %v2198
        %v2210 = vmul.f32 %v1960, %v2198
        %v2211 = vmul.f32 %v1961, %v2199
        %v2212 = vmul.f32 %v1962, %v2199
        %v2213 = vmul.f32 %v1963, %v2200
        %v2214 = vmul.f32 %v1964, %v2200
        %v2215 = vmul.f32 %v1965, %v2201
        %v2216 = vmul.f32 %v1966, %v2201
        %v2217 = vmul.f32 %v1967, %v2202
        %v2218 = vmul.f32 %v1968, %v2202
        %v2219 = vadd.f32 %v2203, 3.0
        %v2220 = vadd.f32 %v2204, 3.0
        %v2221 = vadd.f32 %v2205, 3.0
        %v2222 = vadd.f32 %v2206, 3.0
        %v2223 = vadd.f32 %v2207, 3.0
        %v2224 = vadd.f32 %v2208, 3.0
        %v2225 = vadd.f32 %v2209, 3.0
        %v2226 = vadd.f32 %v2210, 3.0
        %v2227 = vadd.f32 %v2211, 3.0
        %v2228 = vadd.f32 %v2212, 3.0
        %v2229 = vadd.f32 %v2213, 3.0
        %v2230 = vadd.f32 %v2214, 3.0
        %v2231 = vadd.f32 %v2215, 3.0
        %v2232 = vadd.f32 %v2216, 3.0
        %v2233 = vadd.f32 %v2217, 3.0
        %v2234 = vadd.f32 %v2218, 3.0
        %v2235 = vmax.f32 %v2219, 0.0
        %v2236 = vmax.f32 %v2220, 0.0
        %v2237 = vmax.f32 %v2221, 0.0
        %v2238 = vmax.f32 %v2222, 0.0
        %v2239 = vmax.f32 %v2223, 0.0
        %v2240 = vmax.f32 %v2224, 0.0
        %v2241 = vmax.f32 %v2225, 0.0
        %v2242 = vmax.f32 %v2226, 0.0
        %v2243 = vmax.f32 %v2227, 0.0
        %v2244 = vmax.f32 %v2228, 0.0
        %v2245 = vmax.f32 %v2229, 0.0
        %v2246 = vmax.f32 %v2230, 0.0
        %v2247 = vmax.f32 %v2231, 0.0
        %v2248 = vmax.f32 %v2232, 0.0
        %v2249 = vmax.f32 %v2233, 0.0
        %v2250 = vmax.f32 %v2234, 0.0
        %v2251 = vmin.f32 %v2235, 6.0
        %v2252 = vmin.f32 %v2236, 6.0
        %v2253 = vmin.f32 %v2237, 6.0
        %v2254 = vmin.f32 %v2238, 6.0
        %v2255 = vmin.f32 %v2239, 6.0
        %v2256 = vmin.f32 %v2240, 6.0
        %v2257 = vmin.f32 %v2241, 6.0
        %v2258 = vmin.f32 %v2242, 6.0
        %v2259 = vmin.f32 %v2243, 6.0
        %v2260 = vmin.f32 %v2244, 6.0
        %v2261 = vmin.f32 %v2245, 6.0
        %v2262 = vmin.f32 %v2246, 6.0
        %v2263 = vmin.f32 %v2247, 6.0
        %v2264 = vmin.f32 %v2248, 6.0
        %v2265 = vmin.f32 %v2249, 6.0
        %v2266 = vmin.f32 %v2250, 6.0
        %v2267 = vmul.f32 %v2251, 0.16666667
        %v2268 = vmul.f32 %v2252, 0.16666667
        %v2269 = vmul.f32 %v2253, 0.16666667
        %v2270 = vmul.f32 %v2254, 0.16666667
        %v2271 = vmul.f32 %v2255, 0.16666667
        %v2272 = vmul.f32 %v2256, 0.16666667
        %v2273 = vmul.f32 %v2257, 0.16666667
        %v2274 = vmul.f32 %v2258, 0.16666667
        %v2275 = vmul.f32 %v2259, 0.16666667
        %v2276 = vmul.f32 %v2260, 0.16666667
        %v2277 = vmul.f32 %v2261, 0.16666667
        %v2278 = vmul.f32 %v2262, 0.16666667
        %v2279 = vmul.f32 %v2263, 0.16666667
        %v2280 = vmul.f32 %v2264, 0.16666667
        %v2281 = vmul.f32 %v2265, 0.16666667
        %v2282 = vmul.f32 %v2266, 0.16666667
        %v2283 = vmul.f32 %v2203, %v2267
        %v2284 = vmul.f32 %v2204, %v2268
        %v2285 = vmul.f32 %v2205, %v2269
        %v2286 = vmul.f32 %v2206, %v2270
        %v2287 = vmul.f32 %v2207, %v2271
        %v2288 = vmul.f32 %v2208, %v2272
        %v2289 = vmul.f32 %v2209, %v2273
        %v2290 = vmul.f32 %v2210, %v2274
        %v2291 = vmul.f32 %v2211, %v2275
        %v2292 = vmul.f32 %v2212, %v2276
        %v2293 = vmul.f32 %v2213, %v2277
        %v2294 = vmul.f32 %v2214, %v2278
        %v2295 = vmul.f32 %v2215, %v2279
        %v2296 = vmul.f32 %v2216, %v2280
        %v2297 = vmul.f32 %v2217, %v2281
        %v2298 = vmul.f32 %v2218, %v2282
        %v2299 = vld [vmem:[%s10] sm:$0xff]
        %v2300 = vld [vmem:[%s10 + $0x8] sm:$0xff]
        %v2301 = vld [vmem:[%s11] sm:$0xff]
        %v2302 = vld [vmem:[%s11 + $0x8] sm:$0xff]
        %2304 = vset.pattern.permute.xlu0 0
        %2305 = vperm.xlu0 %2304, %v2301
        %v2306 = vpop.permute.xlu0 %2305
        %2309 = vset.pattern.permute.xlu0 0
        %2310 = vperm.xlu0 %2309, %v2302
        %v2311 = vpop.permute.xlu0 %2310
        %v2314 = vsel %vm1971, %v2299, 0
        %v2317 = vsel %vm1971, %v2300, 0
        %2319 = vmatpush.msra.mxu0 0.0
        %2320 = vmatpush.msra.mxu0 0.0
        %2321 = vmatpush.msra.mxu0 0.0
        %2322 = vmatpush.msra.mxu0 0.0
        %2323 = vmatpush.msra.mxu0 0.0
        %2324 = vmatpush.msra.mxu0 0.0
        %2325 = vmatpush.msra.mxu0 0.0
        %2326 = vmatpush.msra.mxu0 0.0
        %2327 = vmatpush.msra.mxu0 %v2297
        %2328 = vmatpush.msra.mxu0 %v2295
        %2329 = vmatpush.msra.mxu0 %v2293
        %2330 = vmatpush.msra.mxu0 %v2291
        %2331 = vmatpush.msra.mxu0 %v2289
        %2332 = vmatpush.msra.mxu0 %v2287
        %2333 = vmatpush.msra.mxu0 %v2285
        %2334 = vmatpush.msra.mxu0 %v2283
        %2335 = vmatmul.f32.gmra.mxu0 %v2314
        %v2336 = vpop.f32.mrf.mxu0
        %v2337 = vadd.f32 %v2306, %v2336
        %2338 = vmatmul.f32.gmra.mxu0 %v2317
        %v2339 = vpop.f32.mrf.mxu0
        %v2340 = vadd.f32 %v2311, %v2339
        %2341 = vdwg.mxu0
        %2342 = vmatpush.msra.mxu0 0.0
        %2343 = vmatpush.msra.mxu0 0.0
        %2344 = vmatpush.msra.mxu0 0.0
        %2345 = vmatpush.msra.mxu0 0.0
        %2346 = vmatpush.msra.mxu0 0.0
        %2347 = vmatpush.msra.mxu0 0.0
        %2348 = vmatpush.msra.mxu0 0.0
        %2349 = vmatpush.msra.mxu0 0.0
        %2350 = vmatpush.msra.mxu0 %v2298
        %2351 = vmatpush.msra.mxu0 %v2296
        %2352 = vmatpush.msra.mxu0 %v2294
        %2353 = vmatpush.msra.mxu0 %v2292
        %2354 = vmatpush.msra.mxu0 %v2290
        %2355 = vmatpush.msra.mxu0 %v2288
        %2356 = vmatpush.msra.mxu0 %v2286
        %2357 = vmatpush.msra.mxu0 %v2284
        %2358 = vmatmul.f32.gmra.mxu0 %v2314
        %v2359 = vpop.f32.mrf.mxu0
        %v2360 = vadd.f32 %v2306, %v2359
        %2361 = vmatmul.f32.gmra.mxu0 %v2317
        %v2362 = vpop.f32.mrf.mxu0
        %v2363 = vadd.f32 %v2311, %v2362
        %2364 = vdwg.mxu0
        %v2365 = vadd.f32 %v2337, 3.0
        %v2366 = vadd.f32 %v2360, 3.0
        %v2367 = vadd.f32 %v2340, 3.0
        %v2368 = vadd.f32 %v2363, 3.0
        %v2369 = vmax.f32 %v2365, 0.0
        %v2370 = vmax.f32 %v2366, 0.0
        %v2371 = vmax.f32 %v2367, 0.0
        %v2372 = vmax.f32 %v2368, 0.0
        %v2373 = vmin.f32 %v2369, 6.0
        %v2374 = vmin.f32 %v2370, 6.0
        %v2375 = vmin.f32 %v2371, 6.0
        %v2376 = vmin.f32 %v2372, 6.0
        %v2377 = vmul.f32 %v2373, 0.16666667
        %v2378 = vmul.f32 %v2374, 0.16666667
        %v2379 = vmul.f32 %v2375, 0.16666667
        %v2380 = vmul.f32 %v2376, 0.16666667
        %v2381 = vmul.f32 %v2337, %v2377
        %v2382 = vmul.f32 %v2360, %v2378
        %v2383 = vmul.f32 %v2340, %v2379
        %v2384 = vmul.f32 %v2363, %v2380
        %v2385 = vld [vmem:[%s12] sm:$0xff]
        %v2386 = vld [vmem:[%s12 + $0x8] sm:$0xff]
        %v2388 = vsel %vm526, %v2385, 0
        %v2391 = vsel %vm526, %v2386, 0
        %2393 = vmatpush.msra.mxu0 0.0
        %2394 = vmatpush.msra.mxu0 0.0
        %2395 = vmatpush.msra.mxu0 0.0
        %2396 = vmatpush.msra.mxu0 0.0
        %2397 = vmatpush.msra.mxu0 0.0
        %2398 = vmatpush.msra.mxu0 0.0
        %2399 = vmatpush.msra.mxu0 0.0
        %2400 = vmatpush.msra.mxu0 0.0
        %2401 = vmatpush.msra.mxu0 0.0
        %2402 = vmatpush.msra.mxu0 0.0
        %2403 = vmatpush.msra.mxu0 0.0
        %2404 = vmatpush.msra.mxu0 0.0
        %2405 = vmatpush.msra.mxu0 0.0
        %2406 = vmatpush.msra.mxu0 0.0
        %2407 = vmatpush.msra.mxu0 %v468
        %2408 = vmatpush.msra.mxu0 %v466
        %2409 = vmatmul.f32.gmra.mxu0 %v2388
        %v2410 = vpop.f32.mrf.mxu0
        %v2411 = vadd.f32 0.0, %v2410
        %2412 = vmatmul.f32.gmra.mxu0 %v2391
        %v2413 = vpop.f32.mrf.mxu0
        %v2414 = vadd.f32 0.0, %v2413
        %2415 = vdwg.mxu0
        %2416 = vmatpush.msra.mxu0 0.0
        %2417 = vmatpush.msra.mxu0 0.0
        %2418 = vmatpush.msra.mxu0 0.0
        %2419 = vmatpush.msra.mxu0 0.0
        %2420 = vmatpush.msra.mxu0 0.0
        %2421 = vmatpush.msra.mxu0 0.0
        %2422 = vmatpush.msra.mxu0 0.0
        %2423 = vmatpush.msra.mxu0 0.0
        %2424 = vmatpush.msra.mxu0 0.0
        %2425 = vmatpush.msra.mxu0 0.0
        %2426 = vmatpush.msra.mxu0 0.0
        %2427 = vmatpush.msra.mxu0 0.0
        %2428 = vmatpush.msra.mxu0 0.0
        %2429 = vmatpush.msra.mxu0 0.0
        %2430 = vmatpush.msra.mxu0 %v469
        %2431 = vmatpush.msra.mxu0 %v467
        %2432 = vmatmul.f32.gmra.mxu0 %v2388
        %v2433 = vpop.f32.mrf.mxu0
        %v2434 = vadd.f32 0.0, %v2433
        %2435 = vmatmul.f32.gmra.mxu0 %v2391
        %v2436 = vpop.f32.mrf.mxu0
        %v2437 = vadd.f32 0.0, %v2436
        %2438 = vdwg.mxu0
        %v2439 = vadd.f32 %v2381, %v2411
        %v2440 = vadd.f32 %v2382, %v2434
        %v2441 = vadd.f32 %v2383, %v2414
        %v2442 = vadd.f32 %v2384, %v2437
        %v2443 = vld [vmem:[%s13] sm:$0xff]
        %v2444 = vld [vmem:[%s13 + $0x8] sm:$0xff]
        %2446 = vset.pattern.permute.xlu0 0
        %2447 = vperm.xlu0 %2446, %v2443
        %v2448 = vpop.permute.xlu0 %2447
        %2451 = vset.pattern.permute.xlu0 0
        %2452 = vperm.xlu0 %2451, %v2444
        %v2453 = vpop.permute.xlu0 %2452
        %v2455 = vadd.f32 %v2439, %v2448
        %v2456 = vadd.f32 %v2440, %v2448
        %v2457 = vadd.f32 %v2441, %v2453
        %v2458 = vadd.f32 %v2442, %v2453
        %2459 = vst [vmem:[%s460] sm:$0xff] %v2455
        %2460 = vst [vmem:[%s460 + $0x8] sm:$0xff] %v2456
        %2461 = vst [vmem:[%s460 + $0x10] sm:$0xff] %v2457
        %2462 = vst [vmem:[%s460 + $0x18] sm:$0xff] %v2458
        %s2463 = sand.u32 %s335, 1
        %s2464 = scalar_lea.sflag [#allocation3], %s2463
        %s2465 = sand.u32 %s335, 1
        %s2466 = smul.addr %s2465, 32
        %s2467 = scalar_lea.vmem [#allocation2], %s2466
        // Predicated region
        $region77: #{tpu_custom_call.1} parent=75 // pred_check
          %p2468 = pneg %p345
        $region78: #{tpu_custom_call.1} parent=75 // pred_check_branch
          %2470 = sbr.rel (%p2468) target = $region80
        $region79: #{tpu_custom_call.1} parent=75 // pred_region
          %2472 = vsyncadd %s2464, 0
          %s2473 = smul.addr %s28, 4
          %s2474 = smul.addr %s2473, 8
          %s2475 = scalar_lea.hbm %s14, %s2474
          %s2476 = sshll.u32 %s2467, 4
          %s2477 = int_to_ptr.vmem [resolvable:$true] %s2476
          %s2478 = sshll.u32 %s2475, 4
          %s2479 = int_to_ptr.hbm [resolvable:$true] %s2478
          %2484 = dma.vmem_to_hbm [thread:$0]  %s2477, 512, %s2479, %s2464, 256, 256, 16
        $region80: #{tpu_custom_call.1} parent=75 // pred_fallthru
          _
      $region76: #{tpu_custom_call.1} parent=5 // pred_fallthru
        _
      %p2485 = scmp.le.s32.totalorder 2, %s23
      // Predicated region
      $region81: #{tpu_custom_call.1} parent=5 // pred_check
        %p2486 = pneg %p2485
      $region82: #{tpu_custom_call.1} parent=5 // pred_check_branch
        %2488 = sbr.rel (%p2486) target = $region84
      $region83: #{tpu_custom_call.1} parent=5 // pred_region
        %s2489 = ssub.s32 %s23, 2
        // Predicated region
        $region85: #{tpu_custom_call.1} parent=83 // pred_check
          %p2490 = pneg %p351
        $region86: #{tpu_custom_call.1} parent=83 // pred_check_branch
          %2492 = sbr.rel (%p2490) target = $region88
        $region87: #{tpu_custom_call.1} parent=83 // pred_region
          %s2493 = sand.u32 %s336, 1
          %s2494 = scalar_lea.sflag [#allocation3], %s2493
          %s2495 = sand.u32 %s336, 1
          %s2496 = smul.addr %s2495, 32
          %s2497 = scalar_lea.vmem [#allocation2], %s2496
          %2499 = dma.done %s2494, 512
        $region88: #{tpu_custom_call.1} parent=83 // pred_fallthru
          _
      $region84: #{tpu_custom_call.1} parent=5 // pred_fallthru
        _
    $region6: #{tpu_custom_call.1} parent=1 // loop_footer
      %s27 = sadd.s32 1, %s23
    $region7: #{tpu_custom_call.1} parent=1 // loop_footer_branch
      %22 = sbr.rel target = $region3
    $region8: #{tpu_custom_call.1} parent=1 // loop_exit
      _
    %2500 = vsyncpa [#allocation3], 1
    %s2501 = scalar_lea.sflag [#allocation3], 1
    %2502 = vsyncpa %s2501, 1

</llo_original>
